<compile_context>
chip_gen: v7x
topology: tpu7x:2x2x1
jax: 0.10.0
libtpu: 0.0.40
codegen_flags: <defaults>
</compile_context>

<pallas_src>
import math
import jax
import jax.numpy as jnp
from jax.experimental import pallas as pl
from jax.experimental.pallas import tpu as pltpu

# ---- config (small shapes consistent with the module; num_heads=8 default) ----
B = 2           # batch (number of graphs)
N = 8           # number of nodes / sequence length
F_IN = 32       # in_features
F_OUT = 32      # out_features
NUM_HEADS = 8
HEAD_DIM = F_OUT // NUM_HEADS
F_HID = 4 * F_OUT
LN_EPS = 1e-5
NEG_INF = -9000000000000000.0  # same constant as the torch code


def _layer_norm(h, gamma, beta):
    mu = jnp.mean(h, axis=-1, keepdims=True)
    xc = h - mu
    var = jnp.mean(xc * xc, axis=-1, keepdims=True)
    inv = jax.lax.rsqrt(var + LN_EPS)
    return xc * inv * gamma + beta


def gtl_kernel(x_ref, adj_ref, wqkv_ref, w1wo_ref, w2_ref, vecs_ref,
               cwide_ref, e_ref, sel_ref, out_ref):
    bb = x_ref.shape[0]                       # graphs handled by this grid step (static)
    R = bb * N                                # token rows
    L = bb * NUM_HEADS * N                    # (graph, head, key) columns

    x2 = x_ref[...].reshape(R, F_IN)
    adj2 = adj_ref[...].reshape(R, N)

    # ---- packed parameters ----
    wqkv = wqkv_ref[...]                      # (F_IN, 3*F_OUT), Q columns pre-scaled
    w1 = w1wo_ref[:, 0:F_HID]                 # (F_OUT, F_HID)   lane-aligned slices
    wo = w1wo_ref[:, F_HID:F_HID + F_OUT]     # (F_OUT, F_OUT)
    w2 = w2_ref[...]                          # (F_HID, F_OUT)

    b_qkv = vecs_ref[0:1, 0:3 * F_OUT]
    b_o   = vecs_ref[1:2, 0:F_OUT]
    b_1   = vecs_ref[2:3, 0:F_HID]
    b_2   = vecs_ref[3:4, 0:F_OUT]
    g_1   = vecs_ref[4:5, 0:F_OUT]
    be_1  = vecs_ref[5:6, 0:F_OUT]
    g_2   = vecs_ref[6:7, 0:F_OUT]
    be_2  = vecs_ref[7:8, 0:F_OUT]

    # ---- host-built constants (all sublane-aligned slices of one slab) ----
    t_exp   = cwide_ref[0:N, :]               # (N, L)   key-index replication for the adj mask
    gb      = cwide_ref[N:N + R, :]           # (R, L)   1.0 where column's graph == row's graph
    bs      = cwide_ref[N + R:N + R + L, :]   # (L, L)   per-(graph,head) block-sum matrix
    e_mat   = e_ref[...]                      # (L, R)   (graph,head,key) <- (graph,key) gather
    selrows = sel_ref[...]                    # (L, F_OUT) head-selector on feature columns

    # ---- fused QKV projection (1/sqrt(head_dim) folded into Q at pack time) ----
    qkv = jnp.dot(x2, wqkv, preferred_element_type=jnp.float32) + b_qkv    # (R, 3*F_OUT)
    q = qkv[:, 0:F_OUT]
    k = qkv[:, F_OUT:2 * F_OUT]
    v = qkv[:, 2 * F_OUT:3 * F_OUT]

    # ---- block-diagonal K/V: one gather matmul each, head h keeps only its own columns ----
    k_blk = jnp.dot(e_mat, k, preferred_element_type=jnp.float32) * selrows   # (L, F_OUT)
    v_blk = jnp.dot(e_mat, v, preferred_element_type=jnp.float32) * selrows   # (L, F_OUT)

    # ---- all graphs x heads scores in a single lane-dense matmul ----
    s = jnp.dot(q, k_blk.T, preferred_element_type=jnp.float32)               # (R, L)

    # adjacency mask replicated to every head block, restricted to the row's own graph
    adjrep = jnp.dot(adj2, t_exp, preferred_element_type=jnp.float32)         # (R, L)
    mask = (adjrep > 0.0) & (gb > 0.0)
    s = jnp.where(mask, s, jnp.float32(NEG_INF))

    # ---- stable softmax, normalized per (graph, head) block of N key columns ----
    # (per-row global max is a valid shift for every block; exact division for precision)
    s = s - jnp.max(s, axis=-1, keepdims=True)
    p = jnp.exp(s) * gb                       # exactly zero cross-graph columns (handles
                                              # fully-masked rows like torch's -9e15 softmax)
    denom = jnp.dot(p, bs, preferred_element_type=jnp.float32)                # (R, L)
    p = p / jnp.maximum(denom, 1e-30)

    # ---- context lands directly in concatenated-head feature layout ----
    ctx = jnp.dot(p, v_blk, preferred_element_type=jnp.float32)               # (R, F_OUT)
    attn_out = jnp.dot(ctx, wo, preferred_element_type=jnp.float32) + b_o

    # ---- residual + norm1 (residual only when in_features == out_features) ----
    if F_IN == F_OUT:
        h1 = _layer_norm(x2 + attn_out, g_1, be_1)
    else:
        h1 = _layer_norm(attn_out, g_1, be_1)

    # ---- feed-forward (Linear -> ReLU -> Linear), dropouts are identity ----
    ff = jnp.dot(h1, w1, preferred_element_type=jnp.float32) + b_1
    ff = jnp.maximum(ff, 0.0)
    ff = jnp.dot(ff, w2, preferred_element_type=jnp.float32) + b_2

    # ---- residual + norm2 ----
    out = _layer_norm(h1 + ff, g_2, be_2)
    out_ref[...] = out.reshape(bb, N, F_OUT).astype(out_ref.dtype)


def pack_params(p):
    """Pack the 16 small parameter arrays into 4 lane-dense kernel inputs."""
    scale = 1.0 / math.sqrt(HEAD_DIM)
    wqkv = jnp.concatenate([p["wq"] * scale, p["wk"], p["wv"]], axis=1)      # (F_IN, 3*F_OUT)
    w1wo = jnp.concatenate([p["w1"], p["wo"]], axis=1)                       # (F_OUT, F_HID+F_OUT)
    w2 = p["w2"]                                                             # (F_HID, F_OUT)
    b_qkv = jnp.concatenate([p["bq"] * scale, p["bk"], p["bv"]], axis=1)     # (1, 3*F_OUT)

    def row(v):
        v = v.reshape(1, -1)
        return jnp.pad(v, ((0, 0), (0, F_HID - v.shape[1])))

    vecs = jnp.concatenate([row(b_qkv), row(p["bo"]), row(p["b1"]), row(p["b2"]),
                            row(p["g1"]), row(p["be1"]), row(p["g2"]), row(p["be2"])],
                           axis=0)                                           # (8, F_HID)
    return wqkv, w1wo, w2, vecs


def build_consts(bb):
    """Host-built constant matrices for the block-diagonal attention (depend only on bb)."""
    Lb = bb * NUM_HEADS * N
    Rb = bb * N
    c = jnp.arange(Lb)
    cg = c // (NUM_HEADS * N)                 # column's graph
    ch = (c // N) % NUM_HEADS                 # column's head
    cm = c % N                                # column's key index
    r = jnp.arange(Rb)
    rg = r // N                               # row's graph
    rm = r % N                                # row's key index
    fh = jnp.arange(F_OUT) // HEAD_DIM        # feature's head

    e_mat = ((cg[:, None] == rg[None, :]) & (cm[:, None] == rm[None, :])).astype(jnp.float32)  # (Lb, Rb)
    selrows = (ch[:, None] == fh[None, :]).astype(jnp.float32)                                  # (Lb, F_OUT)
    t_exp = (jnp.arange(N)[:, None] == cm[None, :]).astype(jnp.float32)                         # (N, Lb)
    gb = (rg[:, None] == cg[None, :]).astype(jnp.float32)                                       # (Rb, Lb)
    bs = ((cg[:, None] == cg[None, :]) & (ch[:, None] == ch[None, :])).astype(jnp.float32)      # (Lb, Lb)
    cwide = jnp.concatenate([t_exp, gb, bs], axis=0)                          # (N+Rb+Lb, Lb)
    return cwide, e_mat, selrows


def _default_block_b():
    # Safe default: fuse the whole batch into one grid step (single-TC chips, and anything
    # we fail to classify).  Only positively-detected dual-TC chips (v7x) split the batch
    # into two "parallel" steps so both TensorCores get work.
    try:
        kind = jax.devices()[0].device_kind.lower()
    except Exception:
        kind = ""
    dual_tc = ("v7" in kind) or ("7x" in kind)
    if dual_tc:
        bb = max(1, (B + 1) // 2)
        if B % bb != 0:
            bb = B
        return bb
    return B


def graph_transformer_layer(x, adj, params, *, block_b=None):
    if block_b is None:
        block_b = _default_block_b()
    if B % block_b != 0:
        block_b = B

    wqkv, w1wo, w2, vecs = pack_params(params)
    cwide, e_mat, selrows = build_consts(block_b)

    in_specs = [
        pl.BlockSpec((block_b, N, F_IN), lambda b: (b, 0, 0)),
        pl.BlockSpec((block_b, N, N), lambda b: (b, 0, 0)),
        pl.BlockSpec(wqkv.shape, lambda b: (0, 0)),
        pl.BlockSpec(w1wo.shape, lambda b: (0, 0)),
        pl.BlockSpec(w2.shape, lambda b: (0, 0)),
        pl.BlockSpec(vecs.shape, lambda b: (0, 0)),
        pl.BlockSpec(cwide.shape, lambda b: (0, 0)),
        pl.BlockSpec(e_mat.shape, lambda b: (0, 0)),
        pl.BlockSpec(selrows.shape, lambda b: (0, 0)),
    ]
    return pl.pallas_call(
        gtl_kernel,
        out_shape=jax.ShapeDtypeStruct((B, N, F_OUT), x.dtype),
        grid_spec=pltpu.PrefetchScalarGridSpec(
            num_scalar_prefetch=0,
            grid=(B // block_b,),
            in_specs=in_specs,
            out_specs=pl.BlockSpec((block_b, N, F_OUT), lambda b: (b, 0, 0)),
        ),
        compiler_params=pltpu.CompilerParams(dimension_semantics=("parallel",)),
    )(x, adj, wqkv, w1wo, w2, vecs, cwide, e_mat, selrows)


def init_params(key):
    ks = jax.random.split(key, 20)

    def xavier(k, fan_in, fan_out):
        limit = math.sqrt(6.0 / (fan_in + fan_out))
        return jax.random.uniform(k, (fan_in, fan_out), jnp.float32, -limit, limit)

    def uni(k, shape, bound):
        return jax.random.uniform(k, shape, jnp.float32, -bound, bound)

    p = {}
    # attention projections (xavier_uniform, as in _reset_parameters)
    p["wq"] = xavier(ks[0], F_IN, F_OUT);  p["bq"] = uni(ks[1], (1, F_OUT), 1.0 / math.sqrt(F_IN))
    p["wk"] = xavier(ks[2], F_IN, F_OUT);  p["bk"] = uni(ks[3], (1, F_OUT), 1.0 / math.sqrt(F_IN))
    p["wv"] = xavier(ks[4], F_IN, F_OUT);  p["bv"] = uni(ks[5], (1, F_OUT), 1.0 / math.sqrt(F_IN))
    p["wo"] = xavier(ks[6], F_OUT, F_OUT); p["bo"] = uni(ks[7], (1, F_OUT), 1.0 / math.sqrt(F_OUT))
    # feed-forward (PyTorch default init)
    p["w1"] = uni(ks[8], (F_OUT, F_HID), 1.0 / math.sqrt(F_OUT))
    p["b1"] = uni(ks[9], (1, F_HID), 1.0 / math.sqrt(F_OUT))
    p["w2"] = uni(ks[10], (F_HID, F_OUT), 1.0 / math.sqrt(F_HID))
    p["b2"] = uni(ks[11], (1, F_OUT), 1.0 / math.sqrt(F_HID))
    # layer norms
    p["g1"] = jnp.ones((1, F_OUT), jnp.float32);  p["be1"] = jnp.zeros((1, F_OUT), jnp.float32)
    p["g2"] = jnp.ones((1, F_OUT), jnp.float32);  p["be2"] = jnp.zeros((1, F_OUT), jnp.float32)
    return p


def ref_forward(x, adj, p):
    """Pure-JAX reference mirroring the torch forward (eval mode)."""
    def ln(h, g, b):
        mu = jnp.mean(h, axis=-1, keepdims=True)
        var = jnp.mean((h - mu) ** 2, axis=-1, keepdims=True)
        return (h - mu) * jax.lax.rsqrt(var + LN_EPS) * g + b

    q = (x @ p["wq"] + p["bq"]).reshape(B, N, NUM_HEADS, HEAD_DIM).transpose(0, 2, 1, 3)
    k = (x @ p["wk"] + p["bk"]).reshape(B, N, NUM_HEADS, HEAD_DIM).transpose(0, 2, 1, 3)
    v = (x @ p["wv"] + p["bv"]).reshape(B, N, NUM_HEADS, HEAD_DIM).transpose(0, 2, 1, 3)
    scores = jnp.einsum("bhqd,bhkd->bhqk", q, k) / math.sqrt(HEAD_DIM)
    mask = (adj > 0.0)[:, None, :, :]
    scores = jnp.where(mask, scores, NEG_INF)
    attn = jax.nn.softmax(scores, axis=-1)
    out = jnp.einsum("bhqk,bhkd->bhqd", attn, v).transpose(0, 2, 1, 3).reshape(B, N, F_OUT)
    out = out @ p["wo"] + p["bo"]
    h1 = ln(x + out, p["g1"], p["be1"]) if F_IN == F_OUT else ln(out, p["g1"], p["be1"])
    ff = jnp.maximum(h1 @ p["w1"] + p["b1"], 0.0) @ p["w2"] + p["b2"]
    return ln(h1 + ff, p["g2"], p["be2"])


if __name__ == "__main__":
    key = jax.random.PRNGKey(0)
    kx, kadj, kp = jax.random.split(key, 3)

    x = jax.random.normal(kx, (B, N, F_IN), jnp.float32)
    adj = (jax.random.uniform(kadj, (B, N, N)) > 0.5).astype(jnp.float32)
    eye = jnp.eye(N, dtype=jnp.float32)[None]
    adj = jnp.maximum(adj, eye)  # self loops so every row has a valid neighbor

    params = init_params(kp)

    out = graph_transformer_layer(x, adj, params)
    out = jax.block_until_ready(out)

    ref = ref_forward(x, adj, params)
    assert out.shape == (B, N, F_OUT)
    assert jnp.allclose(out, ref, atol=1e-4, rtol=1e-4), float(jnp.max(jnp.abs(out - ref)))

    print("KERNEL_OK")
</pallas_src>

<mosaic_0001>
module attributes {stable_mosaic.version = 11 : i64} {
  func.func @gtl_kernel(%arg0: i32, %arg1: memref<2x8x32xf32, #tpu.memory_space<vmem>>, %arg2: memref<2x8x8xf32, #tpu.memory_space<vmem>>, %arg3: memref<32x96xf32, #tpu.memory_space<vmem>>, %arg4: memref<32x160xf32, #tpu.memory_space<vmem>>, %arg5: memref<128x32xf32, #tpu.memory_space<vmem>>, %arg6: memref<8x128xf32, #tpu.memory_space<vmem>>, %arg7: memref<152x128xf32, #tpu.memory_space<vmem>>, %arg8: memref<128x16xf32, #tpu.memory_space<vmem>>, %arg9: memref<128x32xf32, #tpu.memory_space<vmem>>, %arg10: memref<2x8x32xf32, #tpu.memory_space<vmem>>) attributes {dimension_semantics = [#tpu.dimension_semantics<parallel>], iteration_bounds = array<i64: 1>, scalar_prefetch = 0 : i64, scratch_operands = 0 : i64, tpu.core_type = #tpu.core_type<tc>, window_params = [{transform_indices = @transform_0, window_bounds = array<i64: 2, 8, 32>}, {transform_indices = @transform_1, window_bounds = array<i64: 2, 8, 8>}, {pipeline_mode = #tpu.pipeline_mode<synchronous>, transform_indices = @transform_2, window_bounds = array<i64: 32, 96>}, {pipeline_mode = #tpu.pipeline_mode<synchronous>, transform_indices = @transform_3, window_bounds = array<i64: 32, 160>}, {pipeline_mode = #tpu.pipeline_mode<synchronous>, transform_indices = @transform_4, window_bounds = array<i64: 128, 32>}, {pipeline_mode = #tpu.pipeline_mode<synchronous>, transform_indices = @transform_5, window_bounds = array<i64: 8, 128>}, {pipeline_mode = #tpu.pipeline_mode<synchronous>, transform_indices = @transform_6, window_bounds = array<i64: 152, 128>}, {pipeline_mode = #tpu.pipeline_mode<synchronous>, transform_indices = @transform_7, window_bounds = array<i64: 128, 16>}, {pipeline_mode = #tpu.pipeline_mode<synchronous>, transform_indices = @transform_8, window_bounds = array<i64: 128, 32>}, {transform_indices = @transform_9, window_bounds = array<i64: 2, 8, 32>}]} {
    %c0 = arith.constant 0 : index
    %c0_0 = arith.constant 0 : index
    %c0_1 = arith.constant 0 : index
    %0 = vector.load %arg1[%c0, %c0_0, %c0_1] : memref<2x8x32xf32, #tpu.memory_space<vmem>>, vector<2x8x32xf32>
    %1 = vector.shape_cast %0 : vector<2x8x32xf32> to vector<16x32xf32>
    %c0_2 = arith.constant 0 : index
    %c0_3 = arith.constant 0 : index
    %c0_4 = arith.constant 0 : index
    %2 = vector.load %arg2[%c0_2, %c0_3, %c0_4] : memref<2x8x8xf32, #tpu.memory_space<vmem>>, vector<2x8x8xf32>
    %3 = vector.shape_cast %2 : vector<2x8x8xf32> to vector<16x8xf32>
    %c0_5 = arith.constant 0 : index
    %c0_6 = arith.constant 0 : index
    %4 = vector.load %arg3[%c0_5, %c0_6] : memref<32x96xf32, #tpu.memory_space<vmem>>, vector<32x96xf32>
    %c0_7 = arith.constant 0 : index
    %c0_8 = arith.constant 0 : index
    %5 = vector.load %arg4[%c0_7, %c0_8] : memref<32x160xf32, #tpu.memory_space<vmem>>, vector<32x128xf32>
    %c0_9 = arith.constant 0 : index
    %c128 = arith.constant 128 : index
    %6 = vector.load %arg4[%c0_9, %c128] : memref<32x160xf32, #tpu.memory_space<vmem>>, vector<32x32xf32>
    %c0_10 = arith.constant 0 : index
    %c0_11 = arith.constant 0 : index
    %7 = vector.load %arg5[%c0_10, %c0_11] : memref<128x32xf32, #tpu.memory_space<vmem>>, vector<128x32xf32>
    %c0_12 = arith.constant 0 : index
    %c0_13 = arith.constant 0 : index
    %8 = vector.load %arg6[%c0_12, %c0_13] : memref<8x128xf32, #tpu.memory_space<vmem>>, vector<1x96xf32>
    %c1 = arith.constant 1 : index
    %c0_14 = arith.constant 0 : index
    %9 = vector.load %arg6[%c1, %c0_14] : memref<8x128xf32, #tpu.memory_space<vmem>>, vector<1x32xf32>
    %c2 = arith.constant 2 : index
    %c0_15 = arith.constant 0 : index
    %10 = vector.load %arg6[%c2, %c0_15] : memref<8x128xf32, #tpu.memory_space<vmem>>, vector<1x128xf32>
    %c3 = arith.constant 3 : index
    %c0_16 = arith.constant 0 : index
    %11 = vector.load %arg6[%c3, %c0_16] : memref<8x128xf32, #tpu.memory_space<vmem>>, vector<1x32xf32>
    %c4 = arith.constant 4 : index
    %c0_17 = arith.constant 0 : index
    %12 = vector.load %arg6[%c4, %c0_17] : memref<8x128xf32, #tpu.memory_space<vmem>>, vector<1x32xf32>
    %c5 = arith.constant 5 : index
    %c0_18 = arith.constant 0 : index
    %13 = vector.load %arg6[%c5, %c0_18] : memref<8x128xf32, #tpu.memory_space<vmem>>, vector<1x32xf32>
    %c6 = arith.constant 6 : index
    %c0_19 = arith.constant 0 : index
    %14 = vector.load %arg6[%c6, %c0_19] : memref<8x128xf32, #tpu.memory_space<vmem>>, vector<1x32xf32>
    %c7 = arith.constant 7 : index
    %c0_20 = arith.constant 0 : index
    %15 = vector.load %arg6[%c7, %c0_20] : memref<8x128xf32, #tpu.memory_space<vmem>>, vector<1x32xf32>
    %c0_21 = arith.constant 0 : index
    %c0_22 = arith.constant 0 : index
    %16 = vector.load %arg7[%c0_21, %c0_22] : memref<152x128xf32, #tpu.memory_space<vmem>>, vector<8x128xf32>
    %c8 = arith.constant 8 : index
    %c0_23 = arith.constant 0 : index
    %17 = vector.load %arg7[%c8, %c0_23] : memref<152x128xf32, #tpu.memory_space<vmem>>, vector<16x128xf32>
    %c24 = arith.constant 24 : index
    %c0_24 = arith.constant 0 : index
    %18 = vector.load %arg7[%c24, %c0_24] : memref<152x128xf32, #tpu.memory_space<vmem>>, vector<128x128xf32>
    %c0_25 = arith.constant 0 : index
    %c0_26 = arith.constant 0 : index
    %19 = vector.load %arg8[%c0_25, %c0_26] : memref<128x16xf32, #tpu.memory_space<vmem>>, vector<128x16xf32>
    %c0_27 = arith.constant 0 : index
    %c0_28 = arith.constant 0 : index
    %20 = vector.load %arg9[%c0_27, %c0_28] : memref<128x32xf32, #tpu.memory_space<vmem>>, vector<128x32xf32>
    %cst = arith.constant dense<0.000000e+00> : vector<16x96xf32>
    %21 = tpu.matmul %1, %4, %cst {dimension_numbers = #tpu.dot_dimension_numbers<[1], [0], [0], [1], [0, 0, 1, 1], [], []>} : vector<16x32xf32>, vector<32x96xf32>, vector<16x96xf32> -> vector<16x96xf32>
    %22 = vector.broadcast %8 : vector<1x96xf32> to vector<16x96xf32>
    %23 = arith.addf %21, %22 : vector<16x96xf32>
    %24 = vector.extract_strided_slice %23 {offsets = [0, 0], sizes = [16, 32], strides = [1, 1]} : vector<16x96xf32> to vector<16x32xf32>
    %25 = vector.extract_strided_slice %23 {offsets = [0, 32], sizes = [16, 32], strides = [1, 1]} : vector<16x96xf32> to vector<16x32xf32>
    %26 = vector.extract_strided_slice %23 {offsets = [0, 64], sizes = [16, 32], strides = [1, 1]} : vector<16x96xf32> to vector<16x32xf32>
    %cst_29 = arith.constant dense<0.000000e+00> : vector<128x32xf32>
    %27 = tpu.matmul %19, %25, %cst_29 {dimension_numbers = #tpu.dot_dimension_numbers<[1], [0], [0], [1], [0, 0, 1, 1], [], []>} : vector<128x16xf32>, vector<16x32xf32>, vector<128x32xf32> -> vector<128x32xf32>
    %28 = arith.mulf %27, %20 : vector<128x32xf32>
    %cst_30 = arith.constant dense<0.000000e+00> : vector<128x32xf32>
    %29 = tpu.matmul %19, %26, %cst_30 {dimension_numbers = #tpu.dot_dimension_numbers<[1], [0], [0], [1], [0, 0, 1, 1], [], []>} : vector<128x16xf32>, vector<16x32xf32>, vector<128x32xf32> -> vector<128x32xf32>
    %30 = arith.mulf %29, %20 : vector<128x32xf32>
    %31 = tpu.transpose %28, [1, 0] : vector<128x32xf32> -> vector<32x128xf32>
    %cst_31 = arith.constant dense<0.000000e+00> : vector<16x128xf32>
    %32 = tpu.matmul %24, %31, %cst_31 {dimension_numbers = #tpu.dot_dimension_numbers<[1], [0], [0], [1], [0, 0, 1, 1], [], []>} : vector<16x32xf32>, vector<32x128xf32>, vector<16x128xf32> -> vector<16x128xf32>
    %cst_32 = arith.constant dense<0.000000e+00> : vector<16x128xf32>
    %33 = tpu.matmul %3, %16, %cst_32 {dimension_numbers = #tpu.dot_dimension_numbers<[1], [0], [0], [1], [0, 0, 1, 1], [], []>} : vector<16x8xf32>, vector<8x128xf32>, vector<16x128xf32> -> vector<16x128xf32>
    %cst_33 = arith.constant 0.000000e+00 : f32
    %34 = vector.broadcast %cst_33 : f32 to vector<16x128xf32>
    %35 = arith.cmpf ogt, %33, %34 : vector<16x128xf32>
    %cst_34 = arith.constant 0.000000e+00 : f32
    %36 = vector.broadcast %cst_34 : f32 to vector<16x128xf32>
    %37 = arith.cmpf ogt, %17, %36 : vector<16x128xf32>
    %38 = arith.andi %35, %37 : vector<16x128xi1>
    %cst_35 = arith.constant -9.000000e+15 : f32
    %39 = vector.broadcast %cst_35 : f32 to vector<16x128xf32>
    %40 = arith.select %38, %32, %39 : vector<16x128xi1>, vector<16x128xf32>
    %cst_36 = arith.constant dense<0xFF800000> : vector<16xf32>
    %41 = vector.multi_reduction <maximumf>, %40, %cst_36 [1] : vector<16x128xf32> to vector<16xf32>
    %42 = vector.shape_cast %41 : vector<16xf32> to vector<16x1xf32>
    %43 = vector.broadcast %42 : vector<16x1xf32> to vector<16x128xf32>
    %44 = arith.subf %40, %43 : vector<16x128xf32>
    %45 = math.exp %44 : vector<16x128xf32>
    %46 = arith.mulf %45, %17 : vector<16x128xf32>
    %cst_37 = arith.constant dense<0.000000e+00> : vector<16x128xf32>
    %47 = tpu.matmul %46, %18, %cst_37 {dimension_numbers = #tpu.dot_dimension_numbers<[1], [0], [0], [1], [0, 0, 1, 1], [], []>} : vector<16x128xf32>, vector<128x128xf32>, vector<16x128xf32> -> vector<16x128xf32>
    %cst_38 = arith.constant 1.000000e-30 : f32
    %48 = vector.broadcast %cst_38 : f32 to vector<16x128xf32>
    %49 = arith.maximumf %47, %48 : vector<16x128xf32>
    %50 = arith.divf %46, %49 : vector<16x128xf32>
    %cst_39 = arith.constant dense<0.000000e+00> : vector<16x32xf32>
    %51 = tpu.matmul %50, %30, %cst_39 {dimension_numbers = #tpu.dot_dimension_numbers<[1], [0], [0], [1], [0, 0, 1, 1], [], []>} : vector<16x128xf32>, vector<128x32xf32>, vector<16x32xf32> -> vector<16x32xf32>
    %cst_40 = arith.constant dense<0.000000e+00> : vector<16x32xf32>
    %52 = tpu.matmul %51, %6, %cst_40 {dimension_numbers = #tpu.dot_dimension_numbers<[1], [0], [0], [1], [0, 0, 1, 1], [], []>} : vector<16x32xf32>, vector<32x32xf32>, vector<16x32xf32> -> vector<16x32xf32>
    %53 = vector.broadcast %9 : vector<1x32xf32> to vector<16x32xf32>
    %54 = arith.addf %52, %53 : vector<16x32xf32>
    %55 = arith.addf %1, %54 : vector<16x32xf32>
    %cst_41 = arith.constant dense<0.000000e+00> : vector<16xf32>
    %56 = vector.multi_reduction <add>, %55, %cst_41 [1] : vector<16x32xf32> to vector<16xf32>
    %57 = vector.shape_cast %56 : vector<16xf32> to vector<16x1xf32>
    %cst_42 = arith.constant 3.200000e+01 : f32
    %58 = vector.broadcast %cst_42 : f32 to vector<16x1xf32>
    %59 = arith.divf %57, %58 : vector<16x1xf32>
    %60 = vector.broadcast %59 : vector<16x1xf32> to vector<16x32xf32>
    %61 = arith.subf %55, %60 : vector<16x32xf32>
    %62 = arith.mulf %61, %61 : vector<16x32xf32>
    %cst_43 = arith.constant dense<0.000000e+00> : vector<16xf32>
    %63 = vector.multi_reduction <add>, %62, %cst_43 [1] : vector<16x32xf32> to vector<16xf32>
    %64 = vector.shape_cast %63 : vector<16xf32> to vector<16x1xf32>
    %cst_44 = arith.constant 3.200000e+01 : f32
    %65 = vector.broadcast %cst_44 : f32 to vector<16x1xf32>
    %66 = arith.divf %64, %65 : vector<16x1xf32>
    %cst_45 = arith.constant 9.99999974E-6 : f32
    %67 = vector.broadcast %cst_45 : f32 to vector<16x1xf32>
    %68 = arith.addf %66, %67 : vector<16x1xf32>
    %69 = math.rsqrt %68 : vector<16x1xf32>
    %70 = vector.broadcast %69 : vector<16x1xf32> to vector<16x32xf32>
    %71 = arith.mulf %61, %70 : vector<16x32xf32>
    %72 = vector.broadcast %12 : vector<1x32xf32> to vector<16x32xf32>
    %73 = arith.mulf %71, %72 : vector<16x32xf32>
    %74 = vector.broadcast %13 : vector<1x32xf32> to vector<16x32xf32>
    %75 = arith.addf %73, %74 : vector<16x32xf32>
    %cst_46 = arith.constant dense<0.000000e+00> : vector<16x128xf32>
    %76 = tpu.matmul %75, %5, %cst_46 {dimension_numbers = #tpu.dot_dimension_numbers<[1], [0], [0], [1], [0, 0, 1, 1], [], []>} : vector<16x32xf32>, vector<32x128xf32>, vector<16x128xf32> -> vector<16x128xf32>
    %77 = vector.broadcast %10 : vector<1x128xf32> to vector<16x128xf32>
    %78 = arith.addf %76, %77 : vector<16x128xf32>
    %cst_47 = arith.constant 0.000000e+00 : f32
    %79 = vector.broadcast %cst_47 : f32 to vector<16x128xf32>
    %80 = arith.maximumf %78, %79 : vector<16x128xf32>
    %cst_48 = arith.constant dense<0.000000e+00> : vector<16x32xf32>
    %81 = tpu.matmul %80, %7, %cst_48 {dimension_numbers = #tpu.dot_dimension_numbers<[1], [0], [0], [1], [0, 0, 1, 1], [], []>} : vector<16x128xf32>, vector<128x32xf32>, vector<16x32xf32> -> vector<16x32xf32>
    %82 = vector.broadcast %11 : vector<1x32xf32> to vector<16x32xf32>
    %83 = arith.addf %81, %82 : vector<16x32xf32>
    %84 = arith.addf %75, %83 : vector<16x32xf32>
    %cst_49 = arith.constant dense<0.000000e+00> : vector<16xf32>
    %85 = vector.multi_reduction <add>, %84, %cst_49 [1] : vector<16x32xf32> to vector<16xf32>
    %86 = vector.shape_cast %85 : vector<16xf32> to vector<16x1xf32>
    %cst_50 = arith.constant 3.200000e+01 : f32
    %87 = vector.broadcast %cst_50 : f32 to vector<16x1xf32>
    %88 = arith.divf %86, %87 : vector<16x1xf32>
    %89 = vector.broadcast %88 : vector<16x1xf32> to vector<16x32xf32>
    %90 = arith.subf %84, %89 : vector<16x32xf32>
    %91 = arith.mulf %90, %90 : vector<16x32xf32>
    %cst_51 = arith.constant dense<0.000000e+00> : vector<16xf32>
    %92 = vector.multi_reduction <add>, %91, %cst_51 [1] : vector<16x32xf32> to vector<16xf32>
    %93 = vector.shape_cast %92 : vector<16xf32> to vector<16x1xf32>
    %cst_52 = arith.constant 3.200000e+01 : f32
    %94 = vector.broadcast %cst_52 : f32 to vector<16x1xf32>
    %95 = arith.divf %93, %94 : vector<16x1xf32>
    %cst_53 = arith.constant 9.99999974E-6 : f32
    %96 = vector.broadcast %cst_53 : f32 to vector<16x1xf32>
    %97 = arith.addf %95, %96 : vector<16x1xf32>
    %98 = math.rsqrt %97 : vector<16x1xf32>
    %99 = vector.broadcast %98 : vector<16x1xf32> to vector<16x32xf32>
    %100 = arith.mulf %90, %99 : vector<16x32xf32>
    %101 = vector.broadcast %14 : vector<1x32xf32> to vector<16x32xf32>
    %102 = arith.mulf %100, %101 : vector<16x32xf32>
    %103 = vector.broadcast %15 : vector<1x32xf32> to vector<16x32xf32>
    %104 = arith.addf %102, %103 : vector<16x32xf32>
    %105 = vector.shape_cast %104 : vector<16x32xf32> to vector<2x8x32xf32>
    %c0_54 = arith.constant 0 : index
    %c0_55 = arith.constant 0 : index
    %c0_56 = arith.constant 0 : index
    %106 = vector.load %arg10[%c0_54, %c0_55, %c0_56] : memref<2x8x32xf32, #tpu.memory_space<vmem>>, vector<2x8x32xf32>
    tpu.vector_store %arg10[%c0_54, %c0_55, %c0_56], %105 {strides = array<i32>} : memref<2x8x32xf32, #tpu.memory_space<vmem>>, vector<2x8x32xf32>,
    return
  }
  func.func @transform_0(%arg0: i32) -> (i32, i32, i32) {
    %c0_i32 = arith.constant 0 : i32
    %c0_i32_0 = arith.constant 0 : i32
    %c0_i32_1 = arith.constant 0 : i32
    return %arg0, %c0_i32, %c0_i32_0 : i32, i32, i32
  }
  func.func @transform_1(%arg0: i32) -> (i32, i32, i32) {
    %c0_i32 = arith.constant 0 : i32
    %c0_i32_0 = arith.constant 0 : i32
    %c0_i32_1 = arith.constant 0 : i32
    return %arg0, %c0_i32, %c0_i32_0 : i32, i32, i32
  }
  func.func @transform_2(%arg0: i32) -> (i32, i32) {
    %c0_i32 = arith.constant 0 : i32
    %c0_i32_0 = arith.constant 0 : i32
    %c0_i32_1 = arith.constant 0 : i32
    return %c0_i32, %c0_i32_0 : i32, i32
  }
  func.func @transform_3(%arg0: i32) -> (i32, i32) {
    %c0_i32 = arith.constant 0 : i32
    %c0_i32_0 = arith.constant 0 : i32
    %c0_i32_1 = arith.constant 0 : i32
    return %c0_i32, %c0_i32_0 : i32, i32
  }
  func.func @transform_4(%arg0: i32) -> (i32, i32) {
    %c0_i32 = arith.constant 0 : i32
    %c0_i32_0 = arith.constant 0 : i32
    %c0_i32_1 = arith.constant 0 : i32
    return %c0_i32, %c0_i32_0 : i32, i32
  }
  func.func @transform_5(%arg0: i32) -> (i32, i32) {
    %c0_i32 = arith.constant 0 : i32
    %c0_i32_0 = arith.constant 0 : i32
    %c0_i32_1 = arith.constant 0 : i32
    return %c0_i32, %c0_i32_0 : i32, i32
  }
  func.func @transform_6(%arg0: i32) -> (i32, i32) {
    %c0_i32 = arith.constant 0 : i32
    %c0_i32_0 = arith.constant 0 : i32
    %c0_i32_1 = arith.constant 0 : i32
    return %c0_i32, %c0_i32_0 : i32, i32
  }
  func.func @transform_7(%arg0: i32) -> (i32, i32) {
    %c0_i32 = arith.constant 0 : i32
    %c0_i32_0 = arith.constant 0 : i32
    %c0_i32_1 = arith.constant 0 : i32
    return %c0_i32, %c0_i32_0 : i32, i32
  }
  func.func @transform_8(%arg0: i32) -> (i32, i32) {
    %c0_i32 = arith.constant 0 : i32
    %c0_i32_0 = arith.constant 0 : i32
    %c0_i32_1 = arith.constant 0 : i32
    return %c0_i32, %c0_i32_0 : i32, i32
  }
  func.func @transform_9(%arg0: i32) -> (i32, i32, i32) {
    %c0_i32 = arith.constant 0 : i32
    %c0_i32_0 = arith.constant 0 : i32
    %c0_i32_1 = arith.constant 0 : i32
    return %arg0, %c0_i32, %c0_i32_0 : i32, i32, i32
  }
}

</mosaic_0001>

<llo_original>
// kernel: tpu_custom_call.1
$region0: #{tpu_custom_call.1}
  #allocation0 [shape = 'u32[]', space=smem, size = 0x4, offset = 0x4, fixed_abs, tag = 'smem constant byte address 0x4 - core index']
  #allocation1 [shape = 'u32[144,128]{1,0:T(1,128)}', space=vmem, size = 0x12000, scoped, tag = 'internal scratch']
  %s0 = inlined_call_operand.vmem [shape: f32[2,8,32], index: 0, kind: input, shape index: {}]
  %s1 = inlined_call_operand.vmem [shape: f32[2,8,8], index: 1, kind: input, shape index: {}]
  %s2 = inlined_call_operand.vmem [shape: f32[32,96], index: 2, kind: input, shape index: {}]
  %s3 = inlined_call_operand.vmem [shape: f32[32,160], index: 3, kind: input, shape index: {}]
  %s4 = inlined_call_operand.vmem [shape: f32[128,32], index: 4, kind: input, shape index: {}]
  %s5 = inlined_call_operand.vmem [shape: f32[8,128], index: 5, kind: input, shape index: {}]
  %s6 = inlined_call_operand.vmem [shape: f32[152,128], index: 6, kind: input, shape index: {}]
  %s7 = inlined_call_operand.vmem [shape: f32[128,16], index: 7, kind: input, shape index: {}]
  %s8 = inlined_call_operand.vmem [shape: f32[128,32], index: 8, kind: input, shape index: {}]
  %s9 = inlined_call_operand.hbm [shape: f32[2,8,32], index: 9, kind: output, shape index: {}]
  %s10 = sld [smem:[#allocation0]]
  $region46: #{tpu_custom_call.1} parent=0
    _
  %s12 = ssub.s32 1, %s10
  %s13 = scalar_select 0, %s12, %s10
  $region1: #{tpu_custom_call.1} parent=0
    #allocation2 [shape = 'u8[8192]{0}', space=vmem, size = 0x2000, scoped, tag = 'output window, operand 0, single buffered']
    #allocation3 [shape = 's32[1]{0}', space=sflag, size = 0x4, scoped, tag = 'scoped memory for tpu_custom_call.1']
    %14 = vsyncpa [#allocation3], 0
    // Predicated region
    $region2: #{tpu_custom_call.1} parent=1 // pred_check
      _
    $region3: #{tpu_custom_call.1} parent=1 // pred_check_branch
      %16 = sbr.rel (0) target = $region5
    $region4: #{tpu_custom_call.1} parent=1 // pred_region
      _
    $region5: #{tpu_custom_call.1} parent=1 // pred_fallthru
      _
    // Predicated region
    $region6: #{tpu_custom_call.1} parent=1 // pred_check
      _
    $region7: #{tpu_custom_call.1} parent=1 // pred_check_branch
      %18 = sbr.rel (0) target = $region9
    $region8: #{tpu_custom_call.1} parent=1 // pred_region
      _
    $region9: #{tpu_custom_call.1} parent=1 // pred_fallthru
      _
    // Predicated region
    $region10: #{tpu_custom_call.1} parent=1 // pred_check
      _
    $region11: #{tpu_custom_call.1} parent=1 // pred_check_branch
      %20 = sbr.rel (0) target = $region13
    $region12: #{tpu_custom_call.1} parent=1 // pred_region
      _
    $region13: #{tpu_custom_call.1} parent=1 // pred_fallthru
      _
    // Predicated region
    $region14: #{tpu_custom_call.1} parent=1 // pred_check
      _
    $region15: #{tpu_custom_call.1} parent=1 // pred_check_branch
      %22 = sbr.rel (0) target = $region17
    $region16: #{tpu_custom_call.1} parent=1 // pred_region
      _
    $region17: #{tpu_custom_call.1} parent=1 // pred_fallthru
      _
    // Predicated region
    $region18: #{tpu_custom_call.1} parent=1 // pred_check
      _
    $region19: #{tpu_custom_call.1} parent=1 // pred_check_branch
      %24 = sbr.rel (0) target = $region21
    $region20: #{tpu_custom_call.1} parent=1 // pred_region
      _
    $region21: #{tpu_custom_call.1} parent=1 // pred_fallthru
      _
    // Predicated region
    $region22: #{tpu_custom_call.1} parent=1 // pred_check
      _
    $region23: #{tpu_custom_call.1} parent=1 // pred_check_branch
      %26 = sbr.rel (0) target = $region25
    $region24: #{tpu_custom_call.1} parent=1 // pred_region
      _
    $region25: #{tpu_custom_call.1} parent=1 // pred_fallthru
      _
    // Predicated region
    $region26: #{tpu_custom_call.1} parent=1 // pred_check
      _
    $region27: #{tpu_custom_call.1} parent=1 // pred_check_branch
      %28 = sbr.rel (0) target = $region29
    $region28: #{tpu_custom_call.1} parent=1 // pred_region
      _
    $region29: #{tpu_custom_call.1} parent=1 // pred_fallthru
      _
    // Predicated region
    $region30: #{tpu_custom_call.1} parent=1 // pred_check
      _
    $region31: #{tpu_custom_call.1} parent=1 // pred_check_branch
      %30 = sbr.rel (0) target = $region33
    $region32: #{tpu_custom_call.1} parent=1 // pred_region
      _
    $region33: #{tpu_custom_call.1} parent=1 // pred_fallthru
      _
    // Predicated region
    $region34: #{tpu_custom_call.1} parent=1 // pred_check
      _
    $region35: #{tpu_custom_call.1} parent=1 // pred_check_branch
      %32 = sbr.rel (0) target = $region37
    $region36: #{tpu_custom_call.1} parent=1 // pred_region
      _
    $region37: #{tpu_custom_call.1} parent=1 // pred_fallthru
      _
    %v33 = vld [vmem:[%s0] sm:$0xff]
    %v34 = vld [vmem:[%s0 + $0x8] sm:$0xff]
    %v35 = vld [vmem:[%s1] sm:$0xff]
    %v36 = vld [vmem:[%s1 + $0x8] sm:$0xff]
    %v37 = vld [vmem:[%s2] sm:$0xff]
    %v38 = vld [vmem:[%s2 + $0x8] sm:$0xff]
    %v39 = vld [vmem:[%s2 + $0x10] sm:$0xff]
    %v40 = vld [vmem:[%s2 + $0x18] sm:$0xff]
    %v41 = vld [vmem:[%s3] sm:$0xff]
    %v42 = vld [vmem:[%s3 + $0x10] sm:$0xff]
    %v43 = vld [vmem:[%s3 + $0x20] sm:$0xff]
    %v44 = vld [vmem:[%s3 + $0x30] sm:$0xff]
    %v45 = vld [vmem:[%s3 + $0x8] sm:$0xff]
    %v46 = vld [vmem:[%s3 + $0x18] sm:$0xff]
    %v47 = vld [vmem:[%s3 + $0x28] sm:$0xff]
    %v48 = vld [vmem:[%s3 + $0x38] sm:$0xff]
    %v49 = vld [vmem:[%s4] sm:$0xff]
    %v50 = vld [vmem:[%s4 + $0x8] sm:$0xff]
    %v51 = vld [vmem:[%s4 + $0x10] sm:$0xff]
    %v52 = vld [vmem:[%s4 + $0x18] sm:$0xff]
    %v53 = vld [vmem:[%s4 + $0x20] sm:$0xff]
    %v54 = vld [vmem:[%s4 + $0x28] sm:$0xff]
    %v55 = vld [vmem:[%s4 + $0x30] sm:$0xff]
    %v56 = vld [vmem:[%s4 + $0x38] sm:$0xff]
    %v57 = vld [vmem:[%s4 + $0x40] sm:$0xff]
    %v58 = vld [vmem:[%s4 + $0x48] sm:$0xff]
    %v59 = vld [vmem:[%s4 + $0x50] sm:$0xff]
    %v60 = vld [vmem:[%s4 + $0x58] sm:$0xff]
    %v61 = vld [vmem:[%s4 + $0x60] sm:$0xff]
    %v62 = vld [vmem:[%s4 + $0x68] sm:$0xff]
    %v63 = vld [vmem:[%s4 + $0x70] sm:$0xff]
    %v64 = vld [vmem:[%s4 + $0x78] sm:$0xff]
    %v65 = vld [vmem:[%s5] sm:$0x1]
    %v66 = vld [vmem:[%s5 + $0x1] sm:$0x1]
    %v67 = vld [vmem:[%s5 + $0x2] sm:$0x1]
    %v68 = vld [vmem:[%s5 + $0x3] sm:$0x1]
    %v69 = vld [vmem:[%s5 + $0x4] sm:$0x1]
    %v70 = vld [vmem:[%s5 + $0x5] sm:$0x1]
    %v71 = vld [vmem:[%s5 + $0x6] sm:$0x1]
    %v72 = vld [vmem:[%s5 + $0x7] sm:$0x1]
    %v73 = vld [vmem:[%s6] sm:$0xff]
    %v74 = vld [vmem:[%s6 + $0x8] sm:$0xff]
    %v75 = vld [vmem:[%s6 + $0x10] sm:$0xff]
    %v76 = vld [vmem:[%s6 + $0x18] sm:$0xff]
    %v77 = vld [vmem:[%s6 + $0x20] sm:$0xff]
    %v78 = vld [vmem:[%s6 + $0x28] sm:$0xff]
    %v79 = vld [vmem:[%s6 + $0x30] sm:$0xff]
    %v80 = vld [vmem:[%s6 + $0x38] sm:$0xff]
    %v81 = vld [vmem:[%s6 + $0x40] sm:$0xff]
    %v82 = vld [vmem:[%s6 + $0x48] sm:$0xff]
    %v83 = vld [vmem:[%s6 + $0x50] sm:$0xff]
    %v84 = vld [vmem:[%s6 + $0x58] sm:$0xff]
    %v85 = vld [vmem:[%s6 + $0x60] sm:$0xff]
    %v86 = vld [vmem:[%s6 + $0x68] sm:$0xff]
    %v87 = vld [vmem:[%s6 + $0x70] sm:$0xff]
    %v88 = vld [vmem:[%s6 + $0x78] sm:$0xff]
    %v89 = vld [vmem:[%s6 + $0x80] sm:$0xff]
    %v90 = vld [vmem:[%s6 + $0x88] sm:$0xff]
    %v91 = vld [vmem:[%s6 + $0x90] sm:$0xff]
    %v92 = vld [vmem:[%s7] sm:$0xff]
    %v93 = vld [vmem:[%s7 + $0x8] sm:$0xff]
    %v94 = vld [vmem:[%s7 + $0x10] sm:$0xff]
    %v95 = vld [vmem:[%s7 + $0x18] sm:$0xff]
    %v96 = vld [vmem:[%s7 + $0x20] sm:$0xff]
    %v97 = vld [vmem:[%s7 + $0x28] sm:$0xff]
    %v98 = vld [vmem:[%s7 + $0x30] sm:$0xff]
    %v99 = vld [vmem:[%s7 + $0x38] sm:$0xff]
    %v100 = vld [vmem:[%s7 + $0x40] sm:$0xff]
    %v101 = vld [vmem:[%s7 + $0x48] sm:$0xff]
    %v102 = vld [vmem:[%s7 + $0x50] sm:$0xff]
    %v103 = vld [vmem:[%s7 + $0x58] sm:$0xff]
    %v104 = vld [vmem:[%s7 + $0x60] sm:$0xff]
    %v105 = vld [vmem:[%s7 + $0x68] sm:$0xff]
    %v106 = vld [vmem:[%s7 + $0x70] sm:$0xff]
    %v107 = vld [vmem:[%s7 + $0x78] sm:$0xff]
    %v108 = vld [vmem:[%s8] sm:$0xff]
    %v109 = vld [vmem:[%s8 + $0x8] sm:$0xff]
    %v110 = vld [vmem:[%s8 + $0x10] sm:$0xff]
    %v111 = vld [vmem:[%s8 + $0x18] sm:$0xff]
    %v112 = vld [vmem:[%s8 + $0x20] sm:$0xff]
    %v113 = vld [vmem:[%s8 + $0x28] sm:$0xff]
    %v114 = vld [vmem:[%s8 + $0x30] sm:$0xff]
    %v115 = vld [vmem:[%s8 + $0x38] sm:$0xff]
    %v116 = vld [vmem:[%s8 + $0x40] sm:$0xff]
    %v117 = vld [vmem:[%s8 + $0x48] sm:$0xff]
    %v118 = vld [vmem:[%s8 + $0x50] sm:$0xff]
    %v119 = vld [vmem:[%s8 + $0x58] sm:$0xff]
    %v120 = vld [vmem:[%s8 + $0x60] sm:$0xff]
    %v121 = vld [vmem:[%s8 + $0x68] sm:$0xff]
    %v122 = vld [vmem:[%s8 + $0x70] sm:$0xff]
    %v123 = vld [vmem:[%s8 + $0x78] sm:$0xff]
    %v124 = vlaneseq
    %v125 = vshrl.u32 %v124, 7
    %v126 = vsub.s32 0, %v125
    %v127 = vrot.slane %v65, %v126
    %vm128 = vcmask 261120
    %v130 = vsel %vm128, %v33, 0
    %v133 = vsel %vm128, %v34, 0
    %135 = vmatprep.subr.mxu0 0.0
    %136 = vmatpush1.msra.mxu0 %v37
    %137 = vmatprep.subr.mxu0 0.0
    %138 = vmatpush1.msra.mxu0 %v38
    %139 = vmatprep.subr.mxu0 0.0
    %140 = vmatpush1.msra.mxu0 %v39
    %141 = vmatprep.subr.mxu0 0.0
    %142 = vmatpush1.msra.mxu0 %v40
    %143 = vmatprep.subr.mxu0 0.0
    %144 = vmatpush1.msra.mxu0 0.0
    %145 = vmatprep.subr.mxu0 0.0
    %146 = vmatpush1.msra.mxu0 0.0
    %147 = vmatprep.subr.mxu0 0.0
    %148 = vmatpush1.msra.mxu0 0.0
    %149 = vmatprep.subr.mxu0 0.0
    %150 = vmatpush1.msra.mxu0 0.0
    %151 = vmatprep.subr.mxu0 0.0
    %152 = vmatpush1.msra.mxu0 0.0
    %153 = vmatprep.subr.mxu0 0.0
    %154 = vmatpush1.msra.mxu0 0.0
    %155 = vmatprep.subr.mxu0 0.0
    %156 = vmatpush1.msra.mxu0 0.0
    %157 = vmatprep.subr.mxu0 0.0
    %158 = vmatpush1.msra.mxu0 0.0
    %159 = vmatprep.subr.mxu0 0.0
    %160 = vmatpush1.msra.mxu0 0.0
    %161 = vmatprep.subr.mxu0 0.0
    %162 = vmatpush1.msra.mxu0 0.0
    %163 = vmatprep.subr.mxu0 0.0
    %164 = vmatpush1.msra.mxu0 0.0
    %165 = vmatprep.subr.mxu0 0.0
    %166 = vmatpush1.msra.mxu0 0.0
    %167 = vmatprep.subr.mxu0 0.0
    %168 = vmatpush1.msra.mxu0 0.0
    %169 = vmatprep.subr.mxu0 0.0
    %170 = vmatpush1.msra.mxu0 0.0
    %171 = vmatprep.subr.mxu0 0.0
    %172 = vmatpush1.msra.mxu0 0.0
    %173 = vmatprep.subr.mxu0 0.0
    %174 = vmatpush1.msra.mxu0 0.0
    %175 = vmatprep.subr.mxu0 0.0
    %176 = vmatpush1.msra.mxu0 0.0
    %177 = vmatprep.subr.mxu0 0.0
    %178 = vmatpush1.msra.mxu0 0.0
    %179 = vmatprep.subr.mxu0 0.0
    %180 = vmatpush1.msra.mxu0 0.0
    %181 = vmatprep.subr.mxu0 0.0
    %182 = vmatpush1.msra.mxu0 0.0
    %183 = vmatprep.subr.mxu0 0.0
    %184 = vmatpush1.msra.mxu0 0.0
    %185 = vmatprep.subr.mxu0 0.0
    %186 = vmatpush1.msra.mxu0 0.0
    %187 = vmatprep.subr.mxu0 0.0
    %188 = vmatpush1.msra.mxu0 0.0
    %189 = vmatprep.subr.mxu0 0.0
    %190 = vmatpush1.msra.mxu0 0.0
    %191 = vmatprep.subr.mxu0 0.0
    %192 = vmatpush1.msra.mxu0 0.0
    %193 = vmatprep.subr.mxu0 0.0
    %194 = vmatpush1.msra.mxu0 0.0
    %195 = vmatprep.subr.mxu0 0.0
    %196 = vmatpush1.msra.mxu0 0.0
    %197 = vmatprep.subr.mxu0 0.0
    %198 = vmatpush1.msra.mxu0 0.0
    %199 = vmatprep.mubr.f32.mxu0 0.0
    %200 = vmatmul.mubr.f32.gmra.mrb[0].mxu0 %v130
    %v201 = vpop.f32.mrb[0].mxu0
    %v202 = vadd.f32 %v127, %v201
    %v203 = vpop.f32.mrb[0].mxu0
    %204 = vmatprep.mubr.f32.mxu0 0.0
    %205 = vmatmul.mubr.f32.gmra.mrb[0].mxu0 %v133
    %v206 = vpop.f32.mrb[0].mxu0
    %v207 = vadd.f32 %v127, %v206
    %v208 = vpop.f32.mrb[0].mxu0
    %209 = vdwg.mxu0
    %212 = vrot.lane.b32.xlu0 %v202, 96
    %v213 = vpop.permute.xlu0 %212
    %214 = vrot.lane.b32.xlu0 %v207, 96
    %v215 = vpop.permute.xlu0 %214
    %vm218 = vcmask 130048
    %v220 = vsel %vm218, %v92, 0
    %v223 = vsel %vm218, %v93, 0
    %v226 = vsel %vm218, %v94, 0
    %v229 = vsel %vm218, %v95, 0
    %v232 = vsel %vm218, %v96, 0
    %v235 = vsel %vm218, %v97, 0
    %v238 = vsel %vm218, %v98, 0
    %v241 = vsel %vm218, %v99, 0
    %v244 = vsel %vm218, %v100, 0
    %v247 = vsel %vm218, %v101, 0
    %v250 = vsel %vm218, %v102, 0
    %v253 = vsel %vm218, %v103, 0
    %v256 = vsel %vm218, %v104, 0
    %v259 = vsel %vm218, %v105, 0
    %v262 = vsel %vm218, %v106, 0
    %v265 = vsel %vm218, %v107, 0
    %267 = vmatprep.subr.mxu0 0.0
    %268 = vmatpush1.msra.mxu0 %v213
    %269 = vmatprep.subr.mxu0 0.0
    %270 = vmatpush1.msra.mxu0 %v215
    %271 = vmatprep.subr.mxu0 0.0
    %272 = vmatpush1.msra.mxu0 0.0
    %273 = vmatprep.subr.mxu0 0.0
    %274 = vmatpush1.msra.mxu0 0.0
    %275 = vmatprep.subr.mxu0 0.0
    %276 = vmatpush1.msra.mxu0 0.0
    %277 = vmatprep.subr.mxu0 0.0
    %278 = vmatpush1.msra.mxu0 0.0
    %279 = vmatprep.subr.mxu0 0.0
    %280 = vmatpush1.msra.mxu0 0.0
    %281 = vmatprep.subr.mxu0 0.0
    %282 = vmatpush1.msra.mxu0 0.0
    %283 = vmatprep.subr.mxu0 0.0
    %284 = vmatpush1.msra.mxu0 0.0
    %285 = vmatprep.subr.mxu0 0.0
    %286 = vmatpush1.msra.mxu0 0.0
    %287 = vmatprep.subr.mxu0 0.0
    %288 = vmatpush1.msra.mxu0 0.0
    %289 = vmatprep.subr.mxu0 0.0
    %290 = vmatpush1.msra.mxu0 0.0
    %291 = vmatprep.subr.mxu0 0.0
    %292 = vmatpush1.msra.mxu0 0.0
    %293 = vmatprep.subr.mxu0 0.0
    %294 = vmatpush1.msra.mxu0 0.0
    %295 = vmatprep.subr.mxu0 0.0
    %296 = vmatpush1.msra.mxu0 0.0
    %297 = vmatprep.subr.mxu0 0.0
    %298 = vmatpush1.msra.mxu0 0.0
    %299 = vmatprep.subr.mxu0 0.0
    %300 = vmatpush1.msra.mxu0 0.0
    %301 = vmatprep.subr.mxu0 0.0
    %302 = vmatpush1.msra.mxu0 0.0
    %303 = vmatprep.subr.mxu0 0.0
    %304 = vmatpush1.msra.mxu0 0.0
    %305 = vmatprep.subr.mxu0 0.0
    %306 = vmatpush1.msra.mxu0 0.0
    %307 = vmatprep.subr.mxu0 0.0
    %308 = vmatpush1.msra.mxu0 0.0
    %309 = vmatprep.subr.mxu0 0.0
    %310 = vmatpush1.msra.mxu0 0.0
    %311 = vmatprep.subr.mxu0 0.0
    %312 = vmatpush1.msra.mxu0 0.0
    %313 = vmatprep.subr.mxu0 0.0
    %314 = vmatpush1.msra.mxu0 0.0
    %315 = vmatprep.subr.mxu0 0.0
    %316 = vmatpush1.msra.mxu0 0.0
    %317 = vmatprep.subr.mxu0 0.0
    %318 = vmatpush1.msra.mxu0 0.0
    %319 = vmatprep.subr.mxu0 0.0
    %320 = vmatpush1.msra.mxu0 0.0
    %321 = vmatprep.subr.mxu0 0.0
    %322 = vmatpush1.msra.mxu0 0.0
    %323 = vmatprep.subr.mxu0 0.0
    %324 = vmatpush1.msra.mxu0 0.0
    %325 = vmatprep.subr.mxu0 0.0
    %326 = vmatpush1.msra.mxu0 0.0
    %327 = vmatprep.subr.mxu0 0.0
    %328 = vmatpush1.msra.mxu0 0.0
    %329 = vmatprep.subr.mxu0 0.0
    %330 = vmatpush1.msra.mxu0 0.0
    %331 = vmatprep.mubr.f32.mxu0 0.0
    %332 = vmatmul.mubr.f32.gmra.mrb[0].mxu0 %v220
    %v333 = vpop.f32.mrb[0].mxu0
    %v334 = vadd.f32 0.0, %v333
    %v335 = vpop.f32.mrb[0].mxu0
    %336 = vmatprep.mubr.f32.mxu0 0.0
    %337 = vmatmul.mubr.f32.gmra.mrb[0].mxu0 %v223
    %v338 = vpop.f32.mrb[0].mxu0
    %v339 = vadd.f32 0.0, %v338
    %v340 = vpop.f32.mrb[0].mxu0
    %341 = vmatprep.mubr.f32.mxu0 0.0
    %342 = vmatmul.mubr.f32.gmra.mrb[0].mxu0 %v226
    %v343 = vpop.f32.mrb[0].mxu0
    %v344 = vadd.f32 0.0, %v343
    %v345 = vpop.f32.mrb[0].mxu0
    %346 = vmatprep.mubr.f32.mxu0 0.0
    %347 = vmatmul.mubr.f32.gmra.mrb[0].mxu0 %v229
    %v348 = vpop.f32.mrb[0].mxu0
    %v349 = vadd.f32 0.0, %v348
    %v350 = vpop.f32.mrb[0].mxu0
    %351 = vmatprep.mubr.f32.mxu0 0.0
    %352 = vmatmul.mubr.f32.gmra.mrb[0].mxu0 %v232
    %v353 = vpop.f32.mrb[0].mxu0
    %v354 = vadd.f32 0.0, %v353
    %v355 = vpop.f32.mrb[0].mxu0
    %356 = vmatprep.mubr.f32.mxu0 0.0
    %357 = vmatmul.mubr.f32.gmra.mrb[0].mxu0 %v235
    %v358 = vpop.f32.mrb[0].mxu0
    %v359 = vadd.f32 0.0, %v358
    %v360 = vpop.f32.mrb[0].mxu0
    %361 = vmatprep.mubr.f32.mxu0 0.0
    %362 = vmatmul.mubr.f32.gmra.mrb[0].mxu0 %v238
    %v363 = vpop.f32.mrb[0].mxu0
    %v364 = vadd.f32 0.0, %v363
    %v365 = vpop.f32.mrb[0].mxu0
    %366 = vmatprep.mubr.f32.mxu0 0.0
    %367 = vmatmul.mubr.f32.gmra.mrb[0].mxu0 %v241
    %v368 = vpop.f32.mrb[0].mxu0
    %v369 = vadd.f32 0.0, %v368
    %v370 = vpop.f32.mrb[0].mxu0
    %371 = vmatprep.mubr.f32.mxu0 0.0
    %372 = vmatmul.mubr.f32.gmra.mrb[0].mxu0 %v244
    %v373 = vpop.f32.mrb[0].mxu0
    %v374 = vadd.f32 0.0, %v373
    %v375 = vpop.f32.mrb[0].mxu0
    %376 = vmatprep.mubr.f32.mxu0 0.0
    %377 = vmatmul.mubr.f32.gmra.mrb[0].mxu0 %v247
    %v378 = vpop.f32.mrb[0].mxu0
    %v379 = vadd.f32 0.0, %v378
    %v380 = vpop.f32.mrb[0].mxu0
    %381 = vmatprep.mubr.f32.mxu0 0.0
    %382 = vmatmul.mubr.f32.gmra.mrb[0].mxu0 %v250
    %v383 = vpop.f32.mrb[0].mxu0
    %v384 = vadd.f32 0.0, %v383
    %v385 = vpop.f32.mrb[0].mxu0
    %386 = vmatprep.mubr.f32.mxu0 0.0
    %387 = vmatmul.mubr.f32.gmra.mrb[0].mxu0 %v253
    %v388 = vpop.f32.mrb[0].mxu0
    %v389 = vadd.f32 0.0, %v388
    %v390 = vpop.f32.mrb[0].mxu0
    %391 = vmatprep.mubr.f32.mxu0 0.0
    %392 = vmatmul.mubr.f32.gmra.mrb[0].mxu0 %v256
    %v393 = vpop.f32.mrb[0].mxu0
    %v394 = vadd.f32 0.0, %v393
    %v395 = vpop.f32.mrb[0].mxu0
    %396 = vmatprep.mubr.f32.mxu0 0.0
    %397 = vmatmul.mubr.f32.gmra.mrb[0].mxu0 %v259
    %v398 = vpop.f32.mrb[0].mxu0
    %v399 = vadd.f32 0.0, %v398
    %v400 = vpop.f32.mrb[0].mxu0
    %401 = vmatprep.mubr.f32.mxu0 0.0
    %402 = vmatmul.mubr.f32.gmra.mrb[0].mxu0 %v262
    %v403 = vpop.f32.mrb[0].mxu0
    %v404 = vadd.f32 0.0, %v403
    %v405 = vpop.f32.mrb[0].mxu0
    %406 = vmatprep.mubr.f32.mxu0 0.0
    %407 = vmatmul.mubr.f32.gmra.mrb[0].mxu0 %v265
    %v408 = vpop.f32.mrb[0].mxu0
    %v409 = vadd.f32 0.0, %v408
    %v410 = vpop.f32.mrb[0].mxu0
    %411 = vdwg.mxu0
    %v412 = vmul.f32 %v334, %v108
    %v413 = vmul.f32 %v339, %v109
    %v414 = vmul.f32 %v344, %v110
    %v415 = vmul.f32 %v349, %v111
    %v416 = vmul.f32 %v354, %v112
    %v417 = vmul.f32 %v359, %v113
    %v418 = vmul.f32 %v364, %v114
    %v419 = vmul.f32 %v369, %v115
    %v420 = vmul.f32 %v374, %v116
    %v421 = vmul.f32 %v379, %v117
    %v422 = vmul.f32 %v384, %v118
    %v423 = vmul.f32 %v389, %v119
    %v424 = vmul.f32 %v394, %v120
    %v425 = vmul.f32 %v399, %v121
    %v426 = vmul.f32 %v404, %v122
    %v427 = vmul.f32 %v409, %v123
    %428 = vrot.lane.b32.xlu0 %v202, 64
    %v429 = vpop.permute.xlu0 %428
    %430 = vrot.lane.b32.xlu0 %v207, 64
    %v431 = vpop.permute.xlu0 %430
    %434 = vmatprep.subr.mxu0 0.0
    %435 = vmatpush1.msra.mxu0 %v429
    %436 = vmatprep.subr.mxu0 0.0
    %437 = vmatpush1.msra.mxu0 %v431
    %438 = vmatprep.subr.mxu0 0.0
    %439 = vmatpush1.msra.mxu0 0.0
    %440 = vmatprep.subr.mxu0 0.0
    %441 = vmatpush1.msra.mxu0 0.0
    %442 = vmatprep.subr.mxu0 0.0
    %443 = vmatpush1.msra.mxu0 0.0
    %444 = vmatprep.subr.mxu0 0.0
    %445 = vmatpush1.msra.mxu0 0.0
    %446 = vmatprep.subr.mxu0 0.0
    %447 = vmatpush1.msra.mxu0 0.0
    %448 = vmatprep.subr.mxu0 0.0
    %449 = vmatpush1.msra.mxu0 0.0
    %450 = vmatprep.subr.mxu0 0.0
    %451 = vmatpush1.msra.mxu0 0.0
    %452 = vmatprep.subr.mxu0 0.0
    %453 = vmatpush1.msra.mxu0 0.0
    %454 = vmatprep.subr.mxu0 0.0
    %455 = vmatpush1.msra.mxu0 0.0
    %456 = vmatprep.subr.mxu0 0.0
    %457 = vmatpush1.msra.mxu0 0.0
    %458 = vmatprep.subr.mxu0 0.0
    %459 = vmatpush1.msra.mxu0 0.0
    %460 = vmatprep.subr.mxu0 0.0
    %461 = vmatpush1.msra.mxu0 0.0
    %462 = vmatprep.subr.mxu0 0.0
    %463 = vmatpush1.msra.mxu0 0.0
    %464 = vmatprep.subr.mxu0 0.0
    %465 = vmatpush1.msra.mxu0 0.0
    %466 = vmatprep.subr.mxu0 0.0
    %467 = vmatpush1.msra.mxu0 0.0
    %468 = vmatprep.subr.mxu0 0.0
    %469 = vmatpush1.msra.mxu0 0.0
    %470 = vmatprep.subr.mxu0 0.0
    %471 = vmatpush1.msra.mxu0 0.0
    %472 = vmatprep.subr.mxu0 0.0
    %473 = vmatpush1.msra.mxu0 0.0
    %474 = vmatprep.subr.mxu0 0.0
    %475 = vmatpush1.msra.mxu0 0.0
    %476 = vmatprep.subr.mxu0 0.0
    %477 = vmatpush1.msra.mxu0 0.0
    %478 = vmatprep.subr.mxu0 0.0
    %479 = vmatpush1.msra.mxu0 0.0
    %480 = vmatprep.subr.mxu0 0.0
    %481 = vmatpush1.msra.mxu0 0.0
    %482 = vmatprep.subr.mxu0 0.0
    %483 = vmatpush1.msra.mxu0 0.0
    %484 = vmatprep.subr.mxu0 0.0
    %485 = vmatpush1.msra.mxu0 0.0
    %486 = vmatprep.subr.mxu0 0.0
    %487 = vmatpush1.msra.mxu0 0.0
    %488 = vmatprep.subr.mxu0 0.0
    %489 = vmatpush1.msra.mxu0 0.0
    %490 = vmatprep.subr.mxu0 0.0
    %491 = vmatpush1.msra.mxu0 0.0
    %492 = vmatprep.subr.mxu0 0.0
    %493 = vmatpush1.msra.mxu0 0.0
    %494 = vmatprep.subr.mxu0 0.0
    %495 = vmatpush1.msra.mxu0 0.0
    %496 = vmatprep.subr.mxu0 0.0
    %497 = vmatpush1.msra.mxu0 0.0
    %498 = vmatprep.mubr.f32.mxu0 0.0
    %499 = vmatmul.mubr.f32.gmra.mrb[0].mxu0 %v220
    %v500 = vpop.f32.mrb[0].mxu0
    %v501 = vadd.f32 0.0, %v500
    %v502 = vpop.f32.mrb[0].mxu0
    %503 = vmatprep.mubr.f32.mxu0 0.0
    %504 = vmatmul.mubr.f32.gmra.mrb[0].mxu0 %v223
    %v505 = vpop.f32.mrb[0].mxu0
    %v506 = vadd.f32 0.0, %v505
    %v507 = vpop.f32.mrb[0].mxu0
    %508 = vmatprep.mubr.f32.mxu0 0.0
    %509 = vmatmul.mubr.f32.gmra.mrb[0].mxu0 %v226
    %v510 = vpop.f32.mrb[0].mxu0
    %v511 = vadd.f32 0.0, %v510
    %v512 = vpop.f32.mrb[0].mxu0
    %513 = vmatprep.mubr.f32.mxu0 0.0
    %514 = vmatmul.mubr.f32.gmra.mrb[0].mxu0 %v229
    %v515 = vpop.f32.mrb[0].mxu0
    %v516 = vadd.f32 0.0, %v515
    %v517 = vpop.f32.mrb[0].mxu0
    %518 = vmatprep.mubr.f32.mxu0 0.0
    %519 = vmatmul.mubr.f32.gmra.mrb[0].mxu0 %v232
    %v520 = vpop.f32.mrb[0].mxu0
    %v521 = vadd.f32 0.0, %v520
    %v522 = vpop.f32.mrb[0].mxu0
    %523 = vmatprep.mubr.f32.mxu0 0.0
    %524 = vmatmul.mubr.f32.gmra.mrb[0].mxu0 %v235
    %v525 = vpop.f32.mrb[0].mxu0
    %v526 = vadd.f32 0.0, %v525
    %v527 = vpop.f32.mrb[0].mxu0
    %528 = vmatprep.mubr.f32.mxu0 0.0
    %529 = vmatmul.mubr.f32.gmra.mrb[0].mxu0 %v238
    %v530 = vpop.f32.mrb[0].mxu0
    %v531 = vadd.f32 0.0, %v530
    %v532 = vpop.f32.mrb[0].mxu0
    %533 = vmatprep.mubr.f32.mxu0 0.0
    %534 = vmatmul.mubr.f32.gmra.mrb[0].mxu0 %v241
    %v535 = vpop.f32.mrb[0].mxu0
    %v536 = vadd.f32 0.0, %v535
    %v537 = vpop.f32.mrb[0].mxu0
    %538 = vmatprep.mubr.f32.mxu0 0.0
    %539 = vmatmul.mubr.f32.gmra.mrb[0].mxu0 %v244
    %v540 = vpop.f32.mrb[0].mxu0
    %v541 = vadd.f32 0.0, %v540
    %v542 = vpop.f32.mrb[0].mxu0
    %543 = vmatprep.mubr.f32.mxu0 0.0
    %544 = vmatmul.mubr.f32.gmra.mrb[0].mxu0 %v247
    %v545 = vpop.f32.mrb[0].mxu0
    %v546 = vadd.f32 0.0, %v545
    %v547 = vpop.f32.mrb[0].mxu0
    %548 = vmatprep.mubr.f32.mxu0 0.0
    %549 = vmatmul.mubr.f32.gmra.mrb[0].mxu0 %v250
    %v550 = vpop.f32.mrb[0].mxu0
    %v551 = vadd.f32 0.0, %v550
    %v552 = vpop.f32.mrb[0].mxu0
    %553 = vmatprep.mubr.f32.mxu0 0.0
    %554 = vmatmul.mubr.f32.gmra.mrb[0].mxu0 %v253
    %v555 = vpop.f32.mrb[0].mxu0
    %v556 = vadd.f32 0.0, %v555
    %v557 = vpop.f32.mrb[0].mxu0
    %558 = vmatprep.mubr.f32.mxu0 0.0
    %559 = vmatmul.mubr.f32.gmra.mrb[0].mxu0 %v256
    %v560 = vpop.f32.mrb[0].mxu0
    %v561 = vadd.f32 0.0, %v560
    %v562 = vpop.f32.mrb[0].mxu0
    %563 = vmatprep.mubr.f32.mxu0 0.0
    %564 = vmatmul.mubr.f32.gmra.mrb[0].mxu0 %v259
    %v565 = vpop.f32.mrb[0].mxu0
    %v566 = vadd.f32 0.0, %v565
    %v567 = vpop.f32.mrb[0].mxu0
    %568 = vmatprep.mubr.f32.mxu0 0.0
    %569 = vmatmul.mubr.f32.gmra.mrb[0].mxu0 %v262
    %v570 = vpop.f32.mrb[0].mxu0
    %v571 = vadd.f32 0.0, %v570
    %v572 = vpop.f32.mrb[0].mxu0
    %573 = vmatprep.mubr.f32.mxu0 0.0
    %574 = vmatmul.mubr.f32.gmra.mrb[0].mxu0 %v265
    %v575 = vpop.f32.mrb[0].mxu0
    %v576 = vadd.f32 0.0, %v575
    %v577 = vpop.f32.mrb[0].mxu0
    %578 = vdwg.mxu0
    %v579 = vmul.f32 %v501, %v108
    %v580 = vmul.f32 %v506, %v109
    %v581 = vmul.f32 %v511, %v110
    %v582 = vmul.f32 %v516, %v111
    %v583 = vmul.f32 %v521, %v112
    %v584 = vmul.f32 %v526, %v113
    %v585 = vmul.f32 %v531, %v114
    %v586 = vmul.f32 %v536, %v115
    %v587 = vmul.f32 %v541, %v116
    %v588 = vmul.f32 %v546, %v117
    %v589 = vmul.f32 %v551, %v118
    %v590 = vmul.f32 %v556, %v119
    %v591 = vmul.f32 %v561, %v120
    %v592 = vmul.f32 %v566, %v121
    %v593 = vmul.f32 %v571, %v122
    %v594 = vmul.f32 %v576, %v123
    %v595 = vsel %vm128, %v202, 0
    %v597 = vsel %vm128, %v207, 0
    %v600 = vsel %vm128, %v412, 0
    %v603 = vsel %vm128, %v413, 0
    %v606 = vsel %vm128, %v414, 0
    %v609 = vsel %vm128, %v415, 0
    %v612 = vsel %vm128, %v416, 0
    %v615 = vsel %vm128, %v417, 0
    %v618 = vsel %vm128, %v418, 0
    %v621 = vsel %vm128, %v419, 0
    %v624 = vsel %vm128, %v420, 0
    %v627 = vsel %vm128, %v421, 0
    %v630 = vsel %vm128, %v422, 0
    %v633 = vsel %vm128, %v423, 0
    %v636 = vsel %vm128, %v424, 0
    %v639 = vsel %vm128, %v425, 0
    %v642 = vsel %vm128, %v426, 0
    %v645 = vsel %vm128, %v427, 0
    %647 = vmatprep.subr.mxu0 0.0
    %648 = vmatpush1.xpose.msra.mxu0 %v600
    %649 = vmatprep.subr.mxu0 0.0
    %650 = vmatpush1.xpose.msra.mxu0 %v603
    %651 = vmatprep.subr.mxu0 0.0
    %652 = vmatpush1.xpose.msra.mxu0 %v606
    %653 = vmatprep.subr.mxu0 0.0
    %654 = vmatpush1.xpose.msra.mxu0 %v609
    %655 = vmatprep.subr.mxu0 0.0
    %656 = vmatpush1.xpose.msra.mxu0 %v612
    %657 = vmatprep.subr.mxu0 0.0
    %658 = vmatpush1.xpose.msra.mxu0 %v615
    %659 = vmatprep.subr.mxu0 0.0
    %660 = vmatpush1.xpose.msra.mxu0 %v618
    %661 = vmatprep.subr.mxu0 0.0
    %662 = vmatpush1.xpose.msra.mxu0 %v621
    %663 = vmatprep.subr.mxu0 0.0
    %664 = vmatpush1.xpose.msra.mxu0 %v624
    %665 = vmatprep.subr.mxu0 0.0
    %666 = vmatpush1.xpose.msra.mxu0 %v627
    %667 = vmatprep.subr.mxu0 0.0
    %668 = vmatpush1.xpose.msra.mxu0 %v630
    %669 = vmatprep.subr.mxu0 0.0
    %670 = vmatpush1.xpose.msra.mxu0 %v633
    %671 = vmatprep.subr.mxu0 0.0
    %672 = vmatpush1.xpose.msra.mxu0 %v636
    %673 = vmatprep.subr.mxu0 0.0
    %674 = vmatpush1.xpose.msra.mxu0 %v639
    %675 = vmatprep.subr.mxu0 0.0
    %676 = vmatpush1.xpose.msra.mxu0 %v642
    %677 = vmatprep.subr.mxu0 0.0
    %678 = vmatpush1.xpose.msra.mxu0 %v645
    %679 = vmatprep.subr.mxu0 0.0
    %680 = vmatpush1.xpose.msra.mxu0 0.0
    %681 = vmatprep.subr.mxu0 0.0
    %682 = vmatpush1.xpose.msra.mxu0 0.0
    %683 = vmatprep.subr.mxu0 0.0
    %684 = vmatpush1.xpose.msra.mxu0 0.0
    %685 = vmatprep.subr.mxu0 0.0
    %686 = vmatpush1.xpose.msra.mxu0 0.0
    %687 = vmatprep.subr.mxu0 0.0
    %688 = vmatpush1.xpose.msra.mxu0 0.0
    %689 = vmatprep.subr.mxu0 0.0
    %690 = vmatpush1.xpose.msra.mxu0 0.0
    %691 = vmatprep.subr.mxu0 0.0
    %692 = vmatpush1.xpose.msra.mxu0 0.0
    %693 = vmatprep.subr.mxu0 0.0
    %694 = vmatpush1.xpose.msra.mxu0 0.0
    %695 = vmatprep.subr.mxu0 0.0
    %696 = vmatpush1.xpose.msra.mxu0 0.0
    %697 = vmatprep.subr.mxu0 0.0
    %698 = vmatpush1.xpose.msra.mxu0 0.0
    %699 = vmatprep.subr.mxu0 0.0
    %700 = vmatpush1.xpose.msra.mxu0 0.0
    %701 = vmatprep.subr.mxu0 0.0
    %702 = vmatpush1.xpose.msra.mxu0 0.0
    %703 = vmatprep.subr.mxu0 0.0
    %704 = vmatpush1.xpose.msra.mxu0 0.0
    %705 = vmatprep.subr.mxu0 0.0
    %706 = vmatpush1.xpose.msra.mxu0 0.0
    %707 = vmatprep.subr.mxu0 0.0
    %708 = vmatpush1.xpose.msra.mxu0 0.0
    %709 = vmatprep.subr.mxu0 0.0
    %710 = vmatpush1.xpose.msra.mxu0 0.0
    %711 = vmatprep.mubr.f32.mxu0 0.0
    %712 = vmatmul.mubr.f32.gmra.mrb[0].mxu0 %v595
    %v713 = vpop.f32.mrb[0].mxu0
    %v714 = vadd.f32 0.0, %v713
    %v715 = vpop.f32.mrb[0].mxu0
    %716 = vmatprep.mubr.f32.mxu0 0.0
    %717 = vmatmul.mubr.f32.gmra.mrb[0].mxu0 %v597
    %v718 = vpop.f32.mrb[0].mxu0
    %v719 = vadd.f32 0.0, %v718
    %v720 = vpop.f32.mrb[0].mxu0
    %721 = vdwg.mxu0
    %vm722 = vcmask 64512
    %v724 = vsel %vm722, %v35, 0
    %v727 = vsel %vm722, %v36, 0
    %729 = vmatprep.subr.mxu0 0.0
    %730 = vmatpush1.msra.mxu0 %v73
    %731 = vmatprep.subr.mxu0 0.0
    %732 = vmatpush1.msra.mxu0 0.0
    %733 = vmatprep.subr.mxu0 0.0
    %734 = vmatpush1.msra.mxu0 0.0
    %735 = vmatprep.subr.mxu0 0.0
    %736 = vmatpush1.msra.mxu0 0.0
    %737 = vmatprep.subr.mxu0 0.0
    %738 = vmatpush1.msra.mxu0 0.0
    %739 = vmatprep.subr.mxu0 0.0
    %740 = vmatpush1.msra.mxu0 0.0
    %741 = vmatprep.subr.mxu0 0.0
    %742 = vmatpush1.msra.mxu0 0.0
    %743 = vmatprep.subr.mxu0 0.0
    %744 = vmatpush1.msra.mxu0 0.0
    %745 = vmatprep.subr.mxu0 0.0
    %746 = vmatpush1.msra.mxu0 0.0
    %747 = vmatprep.subr.mxu0 0.0
    %748 = vmatpush1.msra.mxu0 0.0
    %749 = vmatprep.subr.mxu0 0.0
    %750 = vmatpush1.msra.mxu0 0.0
    %751 = vmatprep.subr.mxu0 0.0
    %752 = vmatpush1.msra.mxu0 0.0
    %753 = vmatprep.subr.mxu0 0.0
    %754 = vmatpush1.msra.mxu0 0.0
    %755 = vmatprep.subr.mxu0 0.0
    %756 = vmatpush1.msra.mxu0 0.0
    %757 = vmatprep.subr.mxu0 0.0
    %758 = vmatpush1.msra.mxu0 0.0
    %759 = vmatprep.subr.mxu0 0.0
    %760 = vmatpush1.msra.mxu0 0.0
    %761 = vmatprep.subr.mxu0 0.0
    %762 = vmatpush1.msra.mxu0 0.0
    %763 = vmatprep.subr.mxu0 0.0
    %764 = vmatpush1.msra.mxu0 0.0
    %765 = vmatprep.subr.mxu0 0.0
    %766 = vmatpush1.msra.mxu0 0.0
    %767 = vmatprep.subr.mxu0 0.0
    %768 = vmatpush1.msra.mxu0 0.0
    %769 = vmatprep.subr.mxu0 0.0
    %770 = vmatpush1.msra.mxu0 0.0
    %771 = vmatprep.subr.mxu0 0.0
    %772 = vmatpush1.msra.mxu0 0.0
    %773 = vmatprep.subr.mxu0 0.0
    %774 = vmatpush1.msra.mxu0 0.0
    %775 = vmatprep.subr.mxu0 0.0
    %776 = vmatpush1.msra.mxu0 0.0
    %777 = vmatprep.subr.mxu0 0.0
    %778 = vmatpush1.msra.mxu0 0.0
    %779 = vmatprep.subr.mxu0 0.0
    %780 = vmatpush1.msra.mxu0 0.0
    %781 = vmatprep.subr.mxu0 0.0
    %782 = vmatpush1.msra.mxu0 0.0
    %783 = vmatprep.subr.mxu0 0.0
    %784 = vmatpush1.msra.mxu0 0.0
    %785 = vmatprep.subr.mxu0 0.0
    %786 = vmatpush1.msra.mxu0 0.0
    %787 = vmatprep.subr.mxu0 0.0
    %788 = vmatpush1.msra.mxu0 0.0
    %789 = vmatprep.subr.mxu0 0.0
    %790 = vmatpush1.msra.mxu0 0.0
    %791 = vmatprep.subr.mxu0 0.0
    %792 = vmatpush1.msra.mxu0 0.0
    %793 = vmatprep.mubr.f32.mxu0 0.0
    %794 = vmatmul.mubr.f32.gmra.mrb[0].mxu0 %v724
    %v795 = vpop.f32.mrb[0].mxu0
    %v796 = vadd.f32 0.0, %v795
    %v797 = vpop.f32.mrb[0].mxu0
    %798 = vmatprep.mubr.f32.mxu0 0.0
    %799 = vmatmul.mubr.f32.gmra.mrb[0].mxu0 %v727
    %v800 = vpop.f32.mrb[0].mxu0
    %v801 = vadd.f32 0.0, %v800
    %v802 = vpop.f32.mrb[0].mxu0
    %803 = vdwg.mxu0
    %vm804 = vcmp.gt.f32.partialorder %v796, 0.0
    %vm805 = vcmp.gt.f32.partialorder %v801, 0.0
    %vm806 = vcmp.gt.f32.partialorder %v74, 0.0
    %vm807 = vcmp.gt.f32.partialorder %v75, 0.0
    %vm808 = vmand %vm804, %vm806
    %vm809 = vmand %vm805, %vm807
    %v810 = vsel %vm808, %v714, -9e+15
    %v811 = vsel %vm809, %v719, -9e+15
    %812 = vmax.xlane.f32.xlu0 %v810
    %v813 = vpop.xlane.xlu0 %812
    %814 = vmax.xlane.f32.xlu0 %v811
    %v815 = vpop.xlane.xlu0 %814
    %v816 = vsub.f32 %v810, %v813
    %v817 = vsub.f32 %v811, %v815
    %v818 = vmul.f32 %v816, 1.442695
    %v819 = vpow.pop %v818
    %v820 = vmul.f32 %v817, 1.442695
    %v821 = vpow.pop %v820
    %v822 = vmul.f32 %v819, %v74
    %v823 = vmul.f32 %v821, %v75
    %824 = vmatprep.subr.mxu0 0.0
    %825 = vmatpush1.msra.mxu0 %v76
    %826 = vmatprep.subr.mxu0 0.0
    %827 = vmatpush1.msra.mxu0 %v77
    %828 = vmatprep.subr.mxu0 0.0
    %829 = vmatpush1.msra.mxu0 %v78
    %830 = vmatprep.subr.mxu0 0.0
    %831 = vmatpush1.msra.mxu0 %v79
    %832 = vmatprep.subr.mxu0 0.0
    %833 = vmatpush1.msra.mxu0 %v80
    %834 = vmatprep.subr.mxu0 0.0
    %835 = vmatpush1.msra.mxu0 %v81
    %836 = vmatprep.subr.mxu0 0.0
    %837 = vmatpush1.msra.mxu0 %v82
    %838 = vmatprep.subr.mxu0 0.0
    %839 = vmatpush1.msra.mxu0 %v83
    %840 = vmatprep.subr.mxu0 0.0
    %841 = vmatpush1.msra.mxu0 %v84
    %842 = vmatprep.subr.mxu0 0.0
    %843 = vmatpush1.msra.mxu0 %v85
    %844 = vmatprep.subr.mxu0 0.0
    %845 = vmatpush1.msra.mxu0 %v86
    %846 = vmatprep.subr.mxu0 0.0
    %847 = vmatpush1.msra.mxu0 %v87
    %848 = vmatprep.subr.mxu0 0.0
    %849 = vmatpush1.msra.mxu0 %v88
    %850 = vmatprep.subr.mxu0 0.0
    %851 = vmatpush1.msra.mxu0 %v89
    %852 = vmatprep.subr.mxu0 0.0
    %853 = vmatpush1.msra.mxu0 %v90
    %854 = vmatprep.subr.mxu0 0.0
    %855 = vmatpush1.msra.mxu0 %v91
    %856 = vmatprep.subr.mxu0 0.0
    %857 = vmatpush1.msra.mxu0 0.0
    %858 = vmatprep.subr.mxu0 0.0
    %859 = vmatpush1.msra.mxu0 0.0
    %860 = vmatprep.subr.mxu0 0.0
    %861 = vmatpush1.msra.mxu0 0.0
    %862 = vmatprep.subr.mxu0 0.0
    %863 = vmatpush1.msra.mxu0 0.0
    %864 = vmatprep.subr.mxu0 0.0
    %865 = vmatpush1.msra.mxu0 0.0
    %866 = vmatprep.subr.mxu0 0.0
    %867 = vmatpush1.msra.mxu0 0.0
    %868 = vmatprep.subr.mxu0 0.0
    %869 = vmatpush1.msra.mxu0 0.0
    %870 = vmatprep.subr.mxu0 0.0
    %871 = vmatpush1.msra.mxu0 0.0
    %872 = vmatprep.subr.mxu0 0.0
    %873 = vmatpush1.msra.mxu0 0.0
    %874 = vmatprep.subr.mxu0 0.0
    %875 = vmatpush1.msra.mxu0 0.0
    %876 = vmatprep.subr.mxu0 0.0
    %877 = vmatpush1.msra.mxu0 0.0
    %878 = vmatprep.subr.mxu0 0.0
    %879 = vmatpush1.msra.mxu0 0.0
    %880 = vmatprep.subr.mxu0 0.0
    %881 = vmatpush1.msra.mxu0 0.0
    %882 = vmatprep.subr.mxu0 0.0
    %883 = vmatpush1.msra.mxu0 0.0
    %884 = vmatprep.subr.mxu0 0.0
    %885 = vmatpush1.msra.mxu0 0.0
    %886 = vmatprep.subr.mxu0 0.0
    %887 = vmatpush1.msra.mxu0 0.0
    %888 = vmatprep.mubr.f32.mxu0 0.0
    %889 = vmatmul.mubr.f32.gmra.mrb[0].mxu0 %v822
    %v890 = vpop.f32.mrb[0].mxu0
    %v891 = vadd.f32 0.0, %v890
    %v892 = vpop.f32.mrb[0].mxu0
    %893 = vmatprep.mubr.f32.mxu0 0.0
    %894 = vmatmul.mubr.f32.gmra.mrb[0].mxu0 %v823
    %v895 = vpop.f32.mrb[0].mxu0
    %v896 = vadd.f32 0.0, %v895
    %v897 = vpop.f32.mrb[0].mxu0
    %898 = vdwg.mxu0
    %v899 = vmax.f32 %v891, 1e-30
    %v900 = vmax.f32 %v896, 1e-30
    %v901 = vrcp.pop %v899
    %v902 = vmul.f32 %v822, %v901
    %v903 = vrcp.pop %v900
    %v904 = vmul.f32 %v823, %v903
    %905 = vmatprep.subr.mxu0 0.0
    %906 = vmatpush1.msra.mxu0 %v579
    %907 = vmatprep.subr.mxu0 0.0
    %908 = vmatpush1.msra.mxu0 %v580
    %909 = vmatprep.subr.mxu0 0.0
    %910 = vmatpush1.msra.mxu0 %v581
    %911 = vmatprep.subr.mxu0 0.0
    %912 = vmatpush1.msra.mxu0 %v582
    %913 = vmatprep.subr.mxu0 0.0
    %914 = vmatpush1.msra.mxu0 %v583
    %915 = vmatprep.subr.mxu0 0.0
    %916 = vmatpush1.msra.mxu0 %v584
    %917 = vmatprep.subr.mxu0 0.0
    %918 = vmatpush1.msra.mxu0 %v585
    %919 = vmatprep.subr.mxu0 0.0
    %920 = vmatpush1.msra.mxu0 %v586
    %921 = vmatprep.subr.mxu0 0.0
    %922 = vmatpush1.msra.mxu0 %v587
    %923 = vmatprep.subr.mxu0 0.0
    %924 = vmatpush1.msra.mxu0 %v588
    %925 = vmatprep.subr.mxu0 0.0
    %926 = vmatpush1.msra.mxu0 %v589
    %927 = vmatprep.subr.mxu0 0.0
    %928 = vmatpush1.msra.mxu0 %v590
    %929 = vmatprep.subr.mxu0 0.0
    %930 = vmatpush1.msra.mxu0 %v591
    %931 = vmatprep.subr.mxu0 0.0
    %932 = vmatpush1.msra.mxu0 %v592
    %933 = vmatprep.subr.mxu0 0.0
    %934 = vmatpush1.msra.mxu0 %v593
    %935 = vmatprep.subr.mxu0 0.0
    %936 = vmatpush1.msra.mxu0 %v594
    %937 = vmatprep.subr.mxu0 0.0
    %938 = vmatpush1.msra.mxu0 0.0
    %939 = vmatprep.subr.mxu0 0.0
    %940 = vmatpush1.msra.mxu0 0.0
    %941 = vmatprep.subr.mxu0 0.0
    %942 = vmatpush1.msra.mxu0 0.0
    %943 = vmatprep.subr.mxu0 0.0
    %944 = vmatpush1.msra.mxu0 0.0
    %945 = vmatprep.subr.mxu0 0.0
    %946 = vmatpush1.msra.mxu0 0.0
    %947 = vmatprep.subr.mxu0 0.0
    %948 = vmatpush1.msra.mxu0 0.0
    %949 = vmatprep.subr.mxu0 0.0
    %950 = vmatpush1.msra.mxu0 0.0
    %951 = vmatprep.subr.mxu0 0.0
    %952 = vmatpush1.msra.mxu0 0.0
    %953 = vmatprep.subr.mxu0 0.0
    %954 = vmatpush1.msra.mxu0 0.0
    %955 = vmatprep.subr.mxu0 0.0
    %956 = vmatpush1.msra.mxu0 0.0
    %957 = vmatprep.subr.mxu0 0.0
    %958 = vmatpush1.msra.mxu0 0.0
    %959 = vmatprep.subr.mxu0 0.0
    %960 = vmatpush1.msra.mxu0 0.0
    %961 = vmatprep.subr.mxu0 0.0
    %962 = vmatpush1.msra.mxu0 0.0
    %963 = vmatprep.subr.mxu0 0.0
    %964 = vmatpush1.msra.mxu0 0.0
    %965 = vmatprep.subr.mxu0 0.0
    %966 = vmatpush1.msra.mxu0 0.0
    %967 = vmatprep.subr.mxu0 0.0
    %968 = vmatpush1.msra.mxu0 0.0
    %969 = vmatprep.mubr.f32.mxu0 0.0
    %970 = vmatmul.mubr.f32.gmra.mrb[0].mxu0 %v902
    %v971 = vpop.f32.mrb[0].mxu0
    %v972 = vadd.f32 0.0, %v971
    %v973 = vpop.f32.mrb[0].mxu0
    %974 = vmatprep.mubr.f32.mxu0 0.0
    %975 = vmatmul.mubr.f32.gmra.mrb[0].mxu0 %v904
    %v976 = vpop.f32.mrb[0].mxu0
    %v977 = vadd.f32 0.0, %v976
    %v978 = vpop.f32.mrb[0].mxu0
    %979 = vdwg.mxu0
    %v980 = vlaneseq
    %v981 = vshrl.u32 %v980, 7
    %v982 = vsub.s32 0, %v981
    %v983 = vrot.slane %v66, %v982
    %v985 = vsel %vm128, %v972, 0
    %v988 = vsel %vm128, %v977, 0
    %990 = vmatprep.subr.mxu0 0.0
    %991 = vmatpush1.msra.mxu0 %v45
    %992 = vmatprep.subr.mxu0 0.0
    %993 = vmatpush1.msra.mxu0 %v46
    %994 = vmatprep.subr.mxu0 0.0
    %995 = vmatpush1.msra.mxu0 %v47
    %996 = vmatprep.subr.mxu0 0.0
    %997 = vmatpush1.msra.mxu0 %v48
    %998 = vmatprep.subr.mxu0 0.0
    %999 = vmatpush1.msra.mxu0 0.0
    %1000 = vmatprep.subr.mxu0 0.0
    %1001 = vmatpush1.msra.mxu0 0.0
    %1002 = vmatprep.subr.mxu0 0.0
    %1003 = vmatpush1.msra.mxu0 0.0
    %1004 = vmatprep.subr.mxu0 0.0
    %1005 = vmatpush1.msra.mxu0 0.0
    %1006 = vmatprep.subr.mxu0 0.0
    %1007 = vmatpush1.msra.mxu0 0.0
    %1008 = vmatprep.subr.mxu0 0.0
    %1009 = vmatpush1.msra.mxu0 0.0
    %1010 = vmatprep.subr.mxu0 0.0
    %1011 = vmatpush1.msra.mxu0 0.0
    %1012 = vmatprep.subr.mxu0 0.0
    %1013 = vmatpush1.msra.mxu0 0.0
    %1014 = vmatprep.subr.mxu0 0.0
    %1015 = vmatpush1.msra.mxu0 0.0
    %1016 = vmatprep.subr.mxu0 0.0
    %1017 = vmatpush1.msra.mxu0 0.0
    %1018 = vmatprep.subr.mxu0 0.0
    %1019 = vmatpush1.msra.mxu0 0.0
    %1020 = vmatprep.subr.mxu0 0.0
    %1021 = vmatpush1.msra.mxu0 0.0
    %1022 = vmatprep.subr.mxu0 0.0
    %1023 = vmatpush1.msra.mxu0 0.0
    %1024 = vmatprep.subr.mxu0 0.0
    %1025 = vmatpush1.msra.mxu0 0.0
    %1026 = vmatprep.subr.mxu0 0.0
    %1027 = vmatpush1.msra.mxu0 0.0
    %1028 = vmatprep.subr.mxu0 0.0
    %1029 = vmatpush1.msra.mxu0 0.0
    %1030 = vmatprep.subr.mxu0 0.0
    %1031 = vmatpush1.msra.mxu0 0.0
    %1032 = vmatprep.subr.mxu0 0.0
    %1033 = vmatpush1.msra.mxu0 0.0
    %1034 = vmatprep.subr.mxu0 0.0
    %1035 = vmatpush1.msra.mxu0 0.0
    %1036 = vmatprep.subr.mxu0 0.0
    %1037 = vmatpush1.msra.mxu0 0.0
    %1038 = vmatprep.subr.mxu0 0.0
    %1039 = vmatpush1.msra.mxu0 0.0
    %1040 = vmatprep.subr.mxu0 0.0
    %1041 = vmatpush1.msra.mxu0 0.0
    %1042 = vmatprep.subr.mxu0 0.0
    %1043 = vmatpush1.msra.mxu0 0.0
    %1044 = vmatprep.subr.mxu0 0.0
    %1045 = vmatpush1.msra.mxu0 0.0
    %1046 = vmatprep.subr.mxu0 0.0
    %1047 = vmatpush1.msra.mxu0 0.0
    %1048 = vmatprep.subr.mxu0 0.0
    %1049 = vmatpush1.msra.mxu0 0.0
    %1050 = vmatprep.subr.mxu0 0.0
    %1051 = vmatpush1.msra.mxu0 0.0
    %1052 = vmatprep.subr.mxu0 0.0
    %1053 = vmatpush1.msra.mxu0 0.0
    %1054 = vmatprep.mubr.f32.mxu0 0.0
    %1055 = vmatmul.mubr.f32.gmra.mrb[0].mxu0 %v985
    %v1056 = vpop.f32.mrb[0].mxu0
    %v1057 = vadd.f32 %v983, %v1056
    %v1058 = vpop.f32.mrb[0].mxu0
    %1059 = vmatprep.mubr.f32.mxu0 0.0
    %1060 = vmatmul.mubr.f32.gmra.mrb[0].mxu0 %v988
    %v1061 = vpop.f32.mrb[0].mxu0
    %v1062 = vadd.f32 %v983, %v1061
    %v1063 = vpop.f32.mrb[0].mxu0
    %1064 = vdwg.mxu0
    %v1065 = vadd.f32 %v33, %v1057
    %v1066 = vadd.f32 %v34, %v1062
    %v1067 = vsel %vm128, %v1065, 0.0
    %1068 = vadd.xlane.f32.xlu0 %v1067
    %v1069 = vpop.xlane.xlu0 %1068
    %v1070 = vsel %vm128, %v1066, 0.0
    %1071 = vadd.xlane.f32.xlu0 %v1070
    %v1072 = vpop.xlane.xlu0 %1071
    %v1073 = vrcp.pop 32.0
    %v1074 = vmul.f32 %v1069, %v1073
    %v1075 = vmul.f32 %v1072, %v1073
    %v1076 = vsub.f32 %v1065, %v1074
    %v1077 = vsub.f32 %v1066, %v1075
    %v1078 = vmul.f32 %v1076, %v1076
    %v1079 = vmul.f32 %v1077, %v1077
    %v1080 = vsel %vm128, %v1078, 0.0
    %1081 = vadd.xlane.f32.xlu0 %v1080
    %v1082 = vpop.xlane.xlu0 %1081
    %v1083 = vsel %vm128, %v1079, 0.0
    %1084 = vadd.xlane.f32.xlu0 %v1083
    %v1085 = vpop.xlane.xlu0 %1084
    %v1086 = vmul.f32 %v1082, %v1073
    %v1087 = vmul.f32 %v1085, %v1073
    %v1088 = vadd.f32 %v1086, 1e-05
    %v1089 = vadd.f32 %v1087, 1e-05
    %v1090 = vrsqrt.pop %v1088
    %v1091 = vrsqrt.pop %v1089
    %v1092 = vmul.f32 %v1076, %v1090
    %v1093 = vmul.f32 %v1077, %v1091
    %v1094 = vlaneseq
    %v1095 = vshrl.u32 %v1094, 7
    %v1096 = vsub.s32 0, %v1095
    %v1097 = vrot.slane %v69, %v1096
    %v1098 = vmul.f32 %v1092, %v1097
    %v1099 = vmul.f32 %v1093, %v1097
    %v1100 = vlaneseq
    %v1101 = vshrl.u32 %v1100, 7
    %v1102 = vsub.s32 0, %v1101
    %v1103 = vrot.slane %v70, %v1102
    %v1104 = vadd.f32 %v1098, %v1103
    %v1105 = vadd.f32 %v1099, %v1103
    %v1106 = vlaneseq
    %v1107 = vshrl.u32 %v1106, 7
    %v1108 = vsub.s32 0, %v1107
    %v1109 = vrot.slane %v67, %v1108
    %v1111 = vsel %vm128, %v1104, 0
    %v1114 = vsel %vm128, %v1105, 0
    %1116 = vmatprep.subr.mxu0 0.0
    %1117 = vmatpush1.msra.mxu0 %v41
    %1118 = vmatprep.subr.mxu0 0.0
    %1119 = vmatpush1.msra.mxu0 %v42
    %1120 = vmatprep.subr.mxu0 0.0
    %1121 = vmatpush1.msra.mxu0 %v43
    %1122 = vmatprep.subr.mxu0 0.0
    %1123 = vmatpush1.msra.mxu0 %v44
    %1124 = vmatprep.subr.mxu0 0.0
    %1125 = vmatpush1.msra.mxu0 0.0
    %1126 = vmatprep.subr.mxu0 0.0
    %1127 = vmatpush1.msra.mxu0 0.0
    %1128 = vmatprep.subr.mxu0 0.0
    %1129 = vmatpush1.msra.mxu0 0.0
    %1130 = vmatprep.subr.mxu0 0.0
    %1131 = vmatpush1.msra.mxu0 0.0
    %1132 = vmatprep.subr.mxu0 0.0
    %1133 = vmatpush1.msra.mxu0 0.0
    %1134 = vmatprep.subr.mxu0 0.0
    %1135 = vmatpush1.msra.mxu0 0.0
    %1136 = vmatprep.subr.mxu0 0.0
    %1137 = vmatpush1.msra.mxu0 0.0
    %1138 = vmatprep.subr.mxu0 0.0
    %1139 = vmatpush1.msra.mxu0 0.0
    %1140 = vmatprep.subr.mxu0 0.0
    %1141 = vmatpush1.msra.mxu0 0.0
    %1142 = vmatprep.subr.mxu0 0.0
    %1143 = vmatpush1.msra.mxu0 0.0
    %1144 = vmatprep.subr.mxu0 0.0
    %1145 = vmatpush1.msra.mxu0 0.0
    %1146 = vmatprep.subr.mxu0 0.0
    %1147 = vmatpush1.msra.mxu0 0.0
    %1148 = vmatprep.subr.mxu0 0.0
    %1149 = vmatpush1.msra.mxu0 0.0
    %1150 = vmatprep.subr.mxu0 0.0
    %1151 = vmatpush1.msra.mxu0 0.0
    %1152 = vmatprep.subr.mxu0 0.0
    %1153 = vmatpush1.msra.mxu0 0.0
    %1154 = vmatprep.subr.mxu0 0.0
    %1155 = vmatpush1.msra.mxu0 0.0
    %1156 = vmatprep.subr.mxu0 0.0
    %1157 = vmatpush1.msra.mxu0 0.0
    %1158 = vmatprep.subr.mxu0 0.0
    %1159 = vmatpush1.msra.mxu0 0.0
    %1160 = vmatprep.subr.mxu0 0.0
    %1161 = vmatpush1.msra.mxu0 0.0
    %1162 = vmatprep.subr.mxu0 0.0
    %1163 = vmatpush1.msra.mxu0 0.0
    %1164 = vmatprep.subr.mxu0 0.0
    %1165 = vmatpush1.msra.mxu0 0.0
    %1166 = vmatprep.subr.mxu0 0.0
    %1167 = vmatpush1.msra.mxu0 0.0
    %1168 = vmatprep.subr.mxu0 0.0
    %1169 = vmatpush1.msra.mxu0 0.0
    %1170 = vmatprep.subr.mxu0 0.0
    %1171 = vmatpush1.msra.mxu0 0.0
    %1172 = vmatprep.subr.mxu0 0.0
    %1173 = vmatpush1.msra.mxu0 0.0
    %1174 = vmatprep.subr.mxu0 0.0
    %1175 = vmatpush1.msra.mxu0 0.0
    %1176 = vmatprep.subr.mxu0 0.0
    %1177 = vmatpush1.msra.mxu0 0.0
    %1178 = vmatprep.subr.mxu0 0.0
    %1179 = vmatpush1.msra.mxu0 0.0
    %1180 = vmatprep.mubr.f32.mxu0 0.0
    %1181 = vmatmul.mubr.f32.gmra.mrb[0].mxu0 %v1111
    %v1182 = vpop.f32.mrb[0].mxu0
    %v1183 = vadd.f32 %v1109, %v1182
    %v1184 = vpop.f32.mrb[0].mxu0
    %1185 = vmatprep.mubr.f32.mxu0 0.0
    %1186 = vmatmul.mubr.f32.gmra.mrb[0].mxu0 %v1114
    %v1187 = vpop.f32.mrb[0].mxu0
    %v1188 = vadd.f32 %v1109, %v1187
    %v1189 = vpop.f32.mrb[0].mxu0
    %1190 = vdwg.mxu0
    %v1191 = vmax.f32 %v1183, 0.0
    %v1192 = vmax.f32 %v1188, 0.0
    %v1193 = vlaneseq
    %v1194 = vshrl.u32 %v1193, 7
    %v1195 = vsub.s32 0, %v1194
    %v1196 = vrot.slane %v68, %v1195
    %1197 = vmatprep.subr.mxu0 0.0
    %1198 = vmatpush1.msra.mxu0 %v49
    %1199 = vmatprep.subr.mxu0 0.0
    %1200 = vmatpush1.msra.mxu0 %v50
    %1201 = vmatprep.subr.mxu0 0.0
    %1202 = vmatpush1.msra.mxu0 %v51
    %1203 = vmatprep.subr.mxu0 0.0
    %1204 = vmatpush1.msra.mxu0 %v52
    %1205 = vmatprep.subr.mxu0 0.0
    %1206 = vmatpush1.msra.mxu0 %v53
    %1207 = vmatprep.subr.mxu0 0.0
    %1208 = vmatpush1.msra.mxu0 %v54
    %1209 = vmatprep.subr.mxu0 0.0
    %1210 = vmatpush1.msra.mxu0 %v55
    %1211 = vmatprep.subr.mxu0 0.0
    %1212 = vmatpush1.msra.mxu0 %v56
    %1213 = vmatprep.subr.mxu0 0.0
    %1214 = vmatpush1.msra.mxu0 %v57
    %1215 = vmatprep.subr.mxu0 0.0
    %1216 = vmatpush1.msra.mxu0 %v58
    %1217 = vmatprep.subr.mxu0 0.0
    %1218 = vmatpush1.msra.mxu0 %v59
    %1219 = vmatprep.subr.mxu0 0.0
    %1220 = vmatpush1.msra.mxu0 %v60
    %1221 = vmatprep.subr.mxu0 0.0
    %1222 = vmatpush1.msra.mxu0 %v61
    %1223 = vmatprep.subr.mxu0 0.0
    %1224 = vmatpush1.msra.mxu0 %v62
    %1225 = vmatprep.subr.mxu0 0.0
    %1226 = vmatpush1.msra.mxu0 %v63
    %1227 = vmatprep.subr.mxu0 0.0
    %1228 = vmatpush1.msra.mxu0 %v64
    %1229 = vmatprep.subr.mxu0 0.0
    %1230 = vmatpush1.msra.mxu0 0.0
    %1231 = vmatprep.subr.mxu0 0.0
    %1232 = vmatpush1.msra.mxu0 0.0
    %1233 = vmatprep.subr.mxu0 0.0
    %1234 = vmatpush1.msra.mxu0 0.0
    %1235 = vmatprep.subr.mxu0 0.0
    %1236 = vmatpush1.msra.mxu0 0.0
    %1237 = vmatprep.subr.mxu0 0.0
    %1238 = vmatpush1.msra.mxu0 0.0
    %1239 = vmatprep.subr.mxu0 0.0
    %1240 = vmatpush1.msra.mxu0 0.0
    %1241 = vmatprep.subr.mxu0 0.0
    %1242 = vmatpush1.msra.mxu0 0.0
    %1243 = vmatprep.subr.mxu0 0.0
    %1244 = vmatpush1.msra.mxu0 0.0
    %1245 = vmatprep.subr.mxu0 0.0
    %1246 = vmatpush1.msra.mxu0 0.0
    %1247 = vmatprep.subr.mxu0 0.0
    %1248 = vmatpush1.msra.mxu0 0.0
    %1249 = vmatprep.subr.mxu0 0.0
    %1250 = vmatpush1.msra.mxu0 0.0
    %1251 = vmatprep.subr.mxu0 0.0
    %1252 = vmatpush1.msra.mxu0 0.0
    %1253 = vmatprep.subr.mxu0 0.0
    %1254 = vmatpush1.msra.mxu0 0.0
    %1255 = vmatprep.subr.mxu0 0.0
    %1256 = vmatpush1.msra.mxu0 0.0
    %1257 = vmatprep.subr.mxu0 0.0
    %1258 = vmatpush1.msra.mxu0 0.0
    %1259 = vmatprep.subr.mxu0 0.0
    %1260 = vmatpush1.msra.mxu0 0.0
    %1261 = vmatprep.mubr.f32.mxu0 0.0
    %1262 = vmatmul.mubr.f32.gmra.mrb[0].mxu0 %v1191
    %v1263 = vpop.f32.mrb[0].mxu0
    %v1264 = vadd.f32 %v1196, %v1263
    %v1265 = vpop.f32.mrb[0].mxu0
    %1266 = vmatprep.mubr.f32.mxu0 0.0
    %1267 = vmatmul.mubr.f32.gmra.mrb[0].mxu0 %v1192
    %v1268 = vpop.f32.mrb[0].mxu0
    %v1269 = vadd.f32 %v1196, %v1268
    %v1270 = vpop.f32.mrb[0].mxu0
    %1271 = vdwg.mxu0
    %v1272 = vadd.f32 %v1104, %v1264
    %v1273 = vadd.f32 %v1105, %v1269
    %v1274 = vsel %vm128, %v1272, 0.0
    %1275 = vadd.xlane.f32.xlu0 %v1274
    %v1276 = vpop.xlane.xlu0 %1275
    %v1277 = vsel %vm128, %v1273, 0.0
    %1278 = vadd.xlane.f32.xlu0 %v1277
    %v1279 = vpop.xlane.xlu0 %1278
    %v1280 = vmul.f32 %v1276, %v1073
    %v1281 = vmul.f32 %v1279, %v1073
    %v1282 = vsub.f32 %v1272, %v1280
    %v1283 = vsub.f32 %v1273, %v1281
    %v1284 = vmul.f32 %v1282, %v1282
    %v1285 = vmul.f32 %v1283, %v1283
    %v1286 = vsel %vm128, %v1284, 0.0
    %1287 = vadd.xlane.f32.xlu0 %v1286
    %v1288 = vpop.xlane.xlu0 %1287
    %v1289 = vsel %vm128, %v1285, 0.0
    %1290 = vadd.xlane.f32.xlu0 %v1289
    %v1291 = vpop.xlane.xlu0 %1290
    %v1292 = vmul.f32 %v1288, %v1073
    %v1293 = vmul.f32 %v1291, %v1073
    %v1294 = vadd.f32 %v1292, 1e-05
    %v1295 = vadd.f32 %v1293, 1e-05
    %v1296 = vrsqrt.pop %v1294
    %v1297 = vrsqrt.pop %v1295
    %v1298 = vmul.f32 %v1282, %v1296
    %v1299 = vmul.f32 %v1283, %v1297
    %v1300 = vlaneseq
    %v1301 = vshrl.u32 %v1300, 7
    %v1302 = vsub.s32 0, %v1301
    %v1303 = vrot.slane %v71, %v1302
    %v1304 = vmul.f32 %v1298, %v1303
    %v1305 = vmul.f32 %v1299, %v1303
    %v1306 = vlaneseq
    %v1307 = vshrl.u32 %v1306, 7
    %v1308 = vsub.s32 0, %v1307
    %v1309 = vrot.slane %v72, %v1308
    %v1310 = vadd.f32 %v1304, %v1309
    %v1311 = vadd.f32 %v1305, %v1309
    %1312 = vst.msk [vmem:[#allocation2] sm:$0xff] %vm128, %v1310
    %1313 = vst.msk [vmem:[#allocation2 + $0x8] sm:$0xff] %vm128, %v1311
    // Predicated region
    $region38: #{tpu_custom_call.1} parent=1 // pred_check
      _
    $region39: #{tpu_custom_call.1} parent=1 // pred_check_branch
      %1315 = sbr.rel (0) target = $region41
    $region40: #{tpu_custom_call.1} parent=1 // pred_region
      %s1317 = ssub.s32 256, 256
      %1318 = vsyncadd [#allocation3], %s1317
      %s1319 = sshll.u32 [#allocation2], 4
      %s1320 = int_to_ptr.vmem [resolvable:$true] %s1319
      %1325 = dma.vmem_to_hbm [thread:$0]  %s1320, 256, %s9, [#allocation3], 128, 128, 8
    $region41: #{tpu_custom_call.1} parent=1 // pred_fallthru
      _
    // Predicated region
    $region42: #{tpu_custom_call.1} parent=1 // pred_check
      _
    $region43: #{tpu_custom_call.1} parent=1 // pred_check_branch
      %1327 = sbr.rel (0) target = $region45
    $region44: #{tpu_custom_call.1} parent=1 // pred_region
      %1328 = dma.done [#allocation3], 256
    $region45: #{tpu_custom_call.1} parent=1 // pred_fallthru
      _
    %1329 = vsyncpa [#allocation3], 1

</llo_original>
